<compile_context>
chip_gen: v6e
topology: v6e:2x2x1
jax: 0.10.0
libtpu: 0.0.40
codegen_flags: <defaults>
</compile_context>

<pallas_src>
import functools
import math

import jax
import jax.numpy as jnp
from jax.experimental import pallas as pl
from jax.experimental.pallas import tpu as pltpu


def _layernorm(x, w_row, b_row, eps=1e-5):
    # x: (N, C) f32; w_row/b_row: (1, C) f32, broadcast over rows.
    mu = jnp.mean(x, axis=-1, keepdims=True)
    var = jnp.mean((x - mu) ** 2, axis=-1, keepdims=True)   # biased, like torch LN
    return (x - mu) * jax.lax.rsqrt(var + eps) * w_row + b_row


def _gelu_exact(x):
    # nn.GELU default = exact erf formulation (f32 math, erf on EUP)
    return 0.5 * x * (1.0 + jax.lax.erf(x * (1.0 / math.sqrt(2.0))))


def _softmax_last(x):
    m = jnp.max(x, axis=-1, keepdims=True)
    e = jnp.exp(x - m)
    return e * pl.reciprocal(jnp.sum(e, axis=-1, keepdims=True), approx=True)


def block_kernel(x_ref, y_ref,
                 ln1w_ref, ln1b_ref,
                 wqkv_ref,
                 wproj_ref, bproj_ref,
                 ln2w_ref, ln2b_ref,
                 w1_ref, b1_ref,
                 w2_ref, b2_ref,
                 o_ref,
                 *, num_heads, head_dim):
    C = num_heads * head_dim
    N = x_ref.shape[0]
    bf16 = jnp.bfloat16

    # residual add of the two inputs (f32 residual stream)
    x = x_ref[...].astype(jnp.float32) + y_ref[...].astype(jnp.float32)     # (N, C)

    # ---------------- Attention branch ----------------
    h = _layernorm(x, ln1w_ref[...], ln1b_ref[...])                          # (N, C) f32
    # bf16 MXU matmul, f32 accumulate.  q-scale already folded into wqkv.
    qkv = jnp.dot(h.astype(bf16), wqkv_ref[...],
                  preferred_element_type=jnp.float32)                        # (N, 3C) f32

    # Per-head attention with the output projection decomposed per head and
    # accumulated -> no (N, C) concat; proj bias seeds the accumulator.
    attn_acc = jnp.broadcast_to(bproj_ref[...], (N, C)).astype(jnp.float32)
    for hh in range(num_heads):
        lo = hh * head_dim
        q_h = qkv[:, 0 * C + lo: 0 * C + lo + head_dim].astype(bf16)         # (N, D)
        k_h = qkv[:, 1 * C + lo: 1 * C + lo + head_dim].astype(bf16)         # (N, D)
        v_h = qkv[:, 2 * C + lo: 2 * C + lo + head_dim].astype(bf16)         # (N, D)
        s = jnp.dot(q_h, k_h.T, preferred_element_type=jnp.float32)          # (N, N) f32
        p = _softmax_last(s)                                                 # f32
        ho = jnp.dot(p.astype(bf16), v_h,
                     preferred_element_type=jnp.float32)                     # (N, D) f32
        attn_acc = attn_acc + jnp.dot(ho.astype(bf16), wproj_ref[hh],
                                      preferred_element_type=jnp.float32)    # (N, C) f32

    x = x + attn_acc                                                         # (N, C)

    # ---------------- MLP branch ----------------
    h2 = _layernorm(x, ln2w_ref[...], ln2b_ref[...])
    z = jnp.dot(h2.astype(bf16), w1_ref[...],
                preferred_element_type=jnp.float32) + b1_ref[...]            # (N, hidden)
    z = _gelu_exact(z)
    z = jnp.dot(z.astype(bf16), w2_ref[...],
                preferred_element_type=jnp.float32) + b2_ref[...]            # (N, C)

    o_ref[...] = (x + z).astype(o_ref.dtype)


def vit_block(x, y, params, *, num_heads):
    B, N, C = x.shape
    head_dim = C // num_heads

    # Fold the 1/sqrt(head_dim) attention scale into the q output-columns of the
    # qkv weight, then cast all matmul weights to bf16 (MXU path, halves DMA).
    scale = head_dim ** (-0.5)
    wqkv = params["wqkv_t"].at[:, :C].multiply(scale).astype(jnp.bfloat16)     # (C, 3C)
    # Head-major projection weight: (num_heads, head_dim, C).
    wproj = params["wproj_t"].reshape(num_heads, head_dim, C).astype(jnp.bfloat16)
    w1 = params["w1_t"].astype(jnp.bfloat16)                                   # (C, hidden)
    w2 = params["w2_t"].astype(jnp.bfloat16)                                   # (hidden, C)

    act_spec = pl.BlockSpec((None, N, C), lambda b: (b, 0, 0))
    # Whole-array VMEM residency for the (grid-constant) weights/biases:
    # single copy, no per-step double buffering.
    vmem = pl.BlockSpec(memory_space=pltpu.MemorySpace.VMEM)

    kern = functools.partial(block_kernel, num_heads=num_heads, head_dim=head_dim)

    return pl.pallas_call(
        kern,
        out_shape=jax.ShapeDtypeStruct((B, N, C), x.dtype),
        grid_spec=pltpu.PrefetchScalarGridSpec(
            num_scalar_prefetch=0,
            grid=(B,),
            in_specs=[
                act_spec,   # x
                act_spec,   # y
                vmem,       # ln1 weight (1, C) f32
                vmem,       # ln1 bias   (1, C) f32
                vmem,       # qkv weight (C, 3C) bf16, q-scale folded
                vmem,       # proj weight (H, D, C) bf16
                vmem,       # proj bias  (1, C) f32
                vmem,       # ln2 weight (1, C) f32
                vmem,       # ln2 bias   (1, C) f32
                vmem,       # fc1 weight (C, hidden) bf16
                vmem,       # fc1 bias   (1, hidden) f32
                vmem,       # fc2 weight (hidden, C) bf16
                vmem,       # fc2 bias   (1, C) f32
            ],
            out_specs=act_spec,
        ),
        compiler_params=pltpu.CompilerParams(
            dimension_semantics=("parallel",),
            vmem_limit_bytes=64 * 1024 * 1024),
    )(x, y,
      params["ln1_w"], params["ln1_b"],
      wqkv,
      wproj, params["bproj"],
      params["ln2_w"], params["ln2_b"],
      w1, params["b1"],
      w2, params["b2"])


def init_params(key, dim, hidden, dtype=jnp.float32):
    ks = jax.random.split(key, 8)
    s = 0.02
    return {
        # LayerNorms: perturb slightly from (1, 0) so the affine path is exercised.
        "ln1_w": (1.0 + s * jax.random.normal(ks[0], (1, dim))).astype(dtype),
        "ln1_b": (s * jax.random.normal(ks[1], (1, dim))).astype(dtype),
        "ln2_w": (1.0 + s * jax.random.normal(ks[2], (1, dim))).astype(dtype),
        "ln2_b": (s * jax.random.normal(ks[3], (1, dim))).astype(dtype),
        # Linear weights, stored pre-transposed as (in, out); qkv has no bias.
        "wqkv_t":  (s * jax.random.normal(ks[4], (dim, 3 * dim))).astype(dtype),
        "wproj_t": (s * jax.random.normal(ks[5], (dim, dim))).astype(dtype),
        "bproj":   jnp.zeros((1, dim), dtype),
        "w1_t":    (s * jax.random.normal(ks[6], (dim, hidden))).astype(dtype),
        "b1":      jnp.zeros((1, hidden), dtype),
        "w2_t":    (s * jax.random.normal(ks[7], (hidden, dim))).astype(dtype),
        "b2":      jnp.zeros((1, dim), dtype),
    }


def _reference(x, y, p, num_heads):
    # pure-JAX f32 reference for a sanity check
    B, N, C = x.shape
    D = C // num_heads
    x = x + y

    def ln(z, w, b):
        mu = jnp.mean(z, -1, keepdims=True)
        var = jnp.mean((z - mu) ** 2, -1, keepdims=True)
        return (z - mu) / jnp.sqrt(var + 1e-5) * w[0] + b[0]

    h = ln(x, p["ln1_w"], p["ln1_b"])
    qkv = h @ p["wqkv_t"]
    qkv = qkv.reshape(B, N, 3, num_heads, D).transpose(2, 0, 3, 1, 4)
    q, k, v = qkv[0], qkv[1], qkv[2]
    attn = jax.nn.softmax((q * D ** -0.5) @ jnp.swapaxes(k, -1, -2), axis=-1)
    o = (attn @ v).transpose(0, 2, 1, 3).reshape(B, N, C)
    x = x + (o @ p["wproj_t"] + p["bproj"][0])
    h2 = ln(x, p["ln2_w"], p["ln2_b"])
    z = h2 @ p["w1_t"] + p["b1"][0]
    z = 0.5 * z * (1.0 + jax.lax.erf(z / math.sqrt(2.0)))
    x = x + (z @ p["w2_t"] + p["b2"][0])
    return x


if __name__ == "__main__":
    B, N, C = 2, 8, 32
    num_heads = 4
    hidden = int(C * 4.0)

    key = jax.random.PRNGKey(0)
    kx, ky, kp = jax.random.split(key, 3)
    x = jax.random.normal(kx, (B, N, C), jnp.float32)
    y = jax.random.normal(ky, (B, N, C), jnp.float32)
    params = init_params(kp, C, hidden)

    out = vit_block(x, y, params, num_heads=num_heads)
    out = jax.block_until_ready(out)

    ref = _reference(x, y, params, num_heads)
    assert out.shape == (B, N, C)
    # bf16 matmul inputs + approx reciprocal -> looser tolerance vs f32 reference
    assert jnp.allclose(out, ref, atol=2e-2, rtol=2e-2), "mismatch vs reference"
    print("KERNEL_OK")
</pallas_src>

<mosaic_0001>
module attributes {stable_mosaic.version = 11 : i64} {
  func.func @block_kernel(%arg0: i32, %arg1: memref<1x8x32xf32, #tpu.memory_space<vmem>>, %arg2: memref<1x8x32xf32, #tpu.memory_space<vmem>>, %arg3: memref<1x32xf32, #tpu.memory_space<vmem>>, %arg4: memref<1x32xf32, #tpu.memory_space<vmem>>, %arg5: memref<32x96xbf16, #tpu.memory_space<vmem>>, %arg6: memref<4x8x32xbf16, #tpu.memory_space<vmem>>, %arg7: memref<1x32xf32, #tpu.memory_space<vmem>>, %arg8: memref<1x32xf32, #tpu.memory_space<vmem>>, %arg9: memref<1x32xf32, #tpu.memory_space<vmem>>, %arg10: memref<32x128xbf16, #tpu.memory_space<vmem>>, %arg11: memref<1x128xf32, #tpu.memory_space<vmem>>, %arg12: memref<128x32xbf16, #tpu.memory_space<vmem>>, %arg13: memref<1x32xf32, #tpu.memory_space<vmem>>, %arg14: memref<1x8x32xf32, #tpu.memory_space<vmem>>) attributes {dimension_semantics = [#tpu.dimension_semantics<parallel>], iteration_bounds = array<i64: 2>, scalar_prefetch = 0 : i64, scratch_operands = 0 : i64, tpu.core_type = #tpu.core_type<tc>, window_params = [{transform_indices = @transform_0, window_bounds = array<i64: 1, 8, 32>}, {transform_indices = @transform_1, window_bounds = array<i64: 1, 8, 32>}, {pipeline_mode = #tpu.pipeline_mode<synchronous>, transform_indices = @transform_2, window_bounds = array<i64: 1, 32>}, {pipeline_mode = #tpu.pipeline_mode<synchronous>, transform_indices = @transform_3, window_bounds = array<i64: 1, 32>}, {pipeline_mode = #tpu.pipeline_mode<synchronous>, transform_indices = @transform_4, window_bounds = array<i64: 32, 96>}, {pipeline_mode = #tpu.pipeline_mode<synchronous>, transform_indices = @transform_5, window_bounds = array<i64: 4, 8, 32>}, {pipeline_mode = #tpu.pipeline_mode<synchronous>, transform_indices = @transform_6, window_bounds = array<i64: 1, 32>}, {pipeline_mode = #tpu.pipeline_mode<synchronous>, transform_indices = @transform_7, window_bounds = array<i64: 1, 32>}, {pipeline_mode = #tpu.pipeline_mode<synchronous>, transform_indices = @transform_8, window_bounds = array<i64: 1, 32>}, {pipeline_mode = #tpu.pipeline_mode<synchronous>, transform_indices = @transform_9, window_bounds = array<i64: 32, 128>}, {pipeline_mode = #tpu.pipeline_mode<synchronous>, transform_indices = @transform_10, window_bounds = array<i64: 1, 128>}, {pipeline_mode = #tpu.pipeline_mode<synchronous>, transform_indices = @transform_11, window_bounds = array<i64: 128, 32>}, {pipeline_mode = #tpu.pipeline_mode<synchronous>, transform_indices = @transform_12, window_bounds = array<i64: 1, 32>}, {transform_indices = @transform_13, window_bounds = array<i64: 1, 8, 32>}]} {
    %c0 = arith.constant 0 : index
    %c0_0 = arith.constant 0 : index
    %c0_1 = arith.constant 0 : index
    %0 = vector.load %arg1[%c0, %c0_0, %c0_1] : memref<1x8x32xf32, #tpu.memory_space<vmem>>, vector<1x8x32xf32>
    %1 = vector.shape_cast %0 : vector<1x8x32xf32> to vector<8x32xf32>
    %c0_2 = arith.constant 0 : index
    %c0_3 = arith.constant 0 : index
    %c0_4 = arith.constant 0 : index
    %2 = vector.load %arg2[%c0_2, %c0_3, %c0_4] : memref<1x8x32xf32, #tpu.memory_space<vmem>>, vector<1x8x32xf32>
    %3 = vector.shape_cast %2 : vector<1x8x32xf32> to vector<8x32xf32>
    %4 = arith.addf %1, %3 : vector<8x32xf32>
    %c0_5 = arith.constant 0 : index
    %c0_6 = arith.constant 0 : index
    %5 = vector.load %arg3[%c0_5, %c0_6] : memref<1x32xf32, #tpu.memory_space<vmem>>, vector<1x32xf32>
    %c0_7 = arith.constant 0 : index
    %c0_8 = arith.constant 0 : index
    %6 = vector.load %arg4[%c0_7, %c0_8] : memref<1x32xf32, #tpu.memory_space<vmem>>, vector<1x32xf32>
    %cst = arith.constant dense<0.000000e+00> : vector<8xf32>
    %7 = vector.multi_reduction <add>, %4, %cst [1] : vector<8x32xf32> to vector<8xf32>
    %8 = vector.shape_cast %7 : vector<8xf32> to vector<8x1xf32>
    %cst_9 = arith.constant 3.200000e+01 : f32
    %9 = vector.broadcast %cst_9 : f32 to vector<8x1xf32>
    %10 = arith.divf %8, %9 : vector<8x1xf32>
    %11 = vector.broadcast %10 : vector<8x1xf32> to vector<8x32xf32>
    %12 = arith.subf %4, %11 : vector<8x32xf32>
    %13 = arith.mulf %12, %12 : vector<8x32xf32>
    %cst_10 = arith.constant dense<0.000000e+00> : vector<8xf32>
    %14 = vector.multi_reduction <add>, %13, %cst_10 [1] : vector<8x32xf32> to vector<8xf32>
    %15 = vector.shape_cast %14 : vector<8xf32> to vector<8x1xf32>
    %cst_11 = arith.constant 3.200000e+01 : f32
    %16 = vector.broadcast %cst_11 : f32 to vector<8x1xf32>
    %17 = arith.divf %15, %16 : vector<8x1xf32>
    %18 = vector.broadcast %10 : vector<8x1xf32> to vector<8x32xf32>
    %19 = arith.subf %4, %18 : vector<8x32xf32>
    %cst_12 = arith.constant 9.99999974E-6 : f32
    %20 = vector.broadcast %cst_12 : f32 to vector<8x1xf32>
    %21 = arith.addf %17, %20 : vector<8x1xf32>
    %22 = math.rsqrt %21 : vector<8x1xf32>
    %23 = vector.broadcast %22 : vector<8x1xf32> to vector<8x32xf32>
    %24 = arith.mulf %19, %23 : vector<8x32xf32>
    %25 = vector.broadcast %5 : vector<1x32xf32> to vector<8x32xf32>
    %26 = arith.mulf %24, %25 : vector<8x32xf32>
    %27 = vector.broadcast %6 : vector<1x32xf32> to vector<8x32xf32>
    %28 = arith.addf %26, %27 : vector<8x32xf32>
    %29 = arith.truncf %28 : vector<8x32xf32> to vector<8x32xbf16>
    %c0_13 = arith.constant 0 : index
    %c0_14 = arith.constant 0 : index
    %30 = vector.load %arg5[%c0_13, %c0_14] : memref<32x96xbf16, #tpu.memory_space<vmem>>, vector<32x96xbf16>
    %cst_15 = arith.constant dense<0.000000e+00> : vector<8x96xf32>
    %31 = tpu.matmul %29, %30, %cst_15 {dimension_numbers = #tpu.dot_dimension_numbers<[1], [0], [0], [1], [0, 0, 1, 1], [], []>} : vector<8x32xbf16>, vector<32x96xbf16>, vector<8x96xf32> -> vector<8x96xf32>
    %c0_16 = arith.constant 0 : index
    %c0_17 = arith.constant 0 : index
    %32 = vector.load %arg7[%c0_16, %c0_17] : memref<1x32xf32, #tpu.memory_space<vmem>>, vector<1x32xf32>
    %33 = vector.shape_cast %32 : vector<1x32xf32> to vector<1x32xf32>
    %34 = vector.broadcast %33 : vector<1x32xf32> to vector<8x32xf32>
    %35 = vector.extract_strided_slice %31 {offsets = [0, 0], sizes = [8, 8], strides = [1, 1]} : vector<8x96xf32> to vector<8x8xf32>
    %36 = arith.truncf %35 : vector<8x8xf32> to vector<8x8xbf16>
    %37 = vector.extract_strided_slice %31 {offsets = [0, 32], sizes = [8, 8], strides = [1, 1]} : vector<8x96xf32> to vector<8x8xf32>
    %38 = arith.truncf %37 : vector<8x8xf32> to vector<8x8xbf16>
    %39 = vector.extract_strided_slice %31 {offsets = [0, 64], sizes = [8, 8], strides = [1, 1]} : vector<8x96xf32> to vector<8x8xf32>
    %40 = arith.truncf %39 : vector<8x8xf32> to vector<8x8xbf16>
    %41 = tpu.transpose %38, [1, 0] : vector<8x8xbf16> -> vector<8x8xbf16>
    %cst_18 = arith.constant dense<0.000000e+00> : vector<8x8xf32>
    %42 = tpu.matmul %36, %41, %cst_18 {dimension_numbers = #tpu.dot_dimension_numbers<[1], [0], [0], [1], [0, 0, 1, 1], [], []>} : vector<8x8xbf16>, vector<8x8xbf16>, vector<8x8xf32> -> vector<8x8xf32>
    %cst_19 = arith.constant dense<0xFF800000> : vector<8xf32>
    %43 = vector.multi_reduction <maximumf>, %42, %cst_19 [1] : vector<8x8xf32> to vector<8xf32>
    %44 = vector.shape_cast %43 : vector<8xf32> to vector<8x1xf32>
    %45 = vector.broadcast %44 : vector<8x1xf32> to vector<8x8xf32>
    %46 = arith.subf %42, %45 : vector<8x8xf32>
    %47 = math.exp %46 : vector<8x8xf32>
    %cst_20 = arith.constant dense<0.000000e+00> : vector<8xf32>
    %48 = vector.multi_reduction <add>, %47, %cst_20 [1] : vector<8x8xf32> to vector<8xf32>
    %49 = vector.shape_cast %48 : vector<8xf32> to vector<8x1xf32>
    %50 = tpu.reciprocal %49 {approx = true} : vector<8x1xf32> -> vector<8x1xf32>
    %51 = vector.broadcast %50 : vector<8x1xf32> to vector<8x8xf32>
    %52 = arith.mulf %47, %51 : vector<8x8xf32>
    %53 = arith.truncf %52 : vector<8x8xf32> to vector<8x8xbf16>
    %cst_21 = arith.constant dense<0.000000e+00> : vector<8x8xf32>
    %54 = tpu.matmul %53, %40, %cst_21 {dimension_numbers = #tpu.dot_dimension_numbers<[1], [0], [0], [1], [0, 0, 1, 1], [], []>} : vector<8x8xbf16>, vector<8x8xbf16>, vector<8x8xf32> -> vector<8x8xf32>
    %55 = arith.truncf %54 : vector<8x8xf32> to vector<8x8xbf16>
    %c0_22 = arith.constant 0 : index
    %c0_23 = arith.constant 0 : index
    %c0_24 = arith.constant 0 : index
    %56 = vector.load %arg6[%c0_22, %c0_23, %c0_24] : memref<4x8x32xbf16, #tpu.memory_space<vmem>>, vector<1x8x32xbf16>
    %57 = vector.shape_cast %56 : vector<1x8x32xbf16> to vector<8x32xbf16>
    %cst_25 = arith.constant dense<0.000000e+00> : vector<8x32xf32>
    %58 = tpu.matmul %55, %57, %cst_25 {dimension_numbers = #tpu.dot_dimension_numbers<[1], [0], [0], [1], [0, 0, 1, 1], [], []>} : vector<8x8xbf16>, vector<8x32xbf16>, vector<8x32xf32> -> vector<8x32xf32>
    %59 = arith.addf %34, %58 : vector<8x32xf32>
    %60 = vector.extract_strided_slice %31 {offsets = [0, 8], sizes = [8, 8], strides = [1, 1]} : vector<8x96xf32> to vector<8x8xf32>
    %61 = arith.truncf %60 : vector<8x8xf32> to vector<8x8xbf16>
    %62 = vector.extract_strided_slice %31 {offsets = [0, 40], sizes = [8, 8], strides = [1, 1]} : vector<8x96xf32> to vector<8x8xf32>
    %63 = arith.truncf %62 : vector<8x8xf32> to vector<8x8xbf16>
    %64 = vector.extract_strided_slice %31 {offsets = [0, 72], sizes = [8, 8], strides = [1, 1]} : vector<8x96xf32> to vector<8x8xf32>
    %65 = arith.truncf %64 : vector<8x8xf32> to vector<8x8xbf16>
    %66 = tpu.transpose %63, [1, 0] : vector<8x8xbf16> -> vector<8x8xbf16>
    %cst_26 = arith.constant dense<0.000000e+00> : vector<8x8xf32>
    %67 = tpu.matmul %61, %66, %cst_26 {dimension_numbers = #tpu.dot_dimension_numbers<[1], [0], [0], [1], [0, 0, 1, 1], [], []>} : vector<8x8xbf16>, vector<8x8xbf16>, vector<8x8xf32> -> vector<8x8xf32>
    %cst_27 = arith.constant dense<0xFF800000> : vector<8xf32>
    %68 = vector.multi_reduction <maximumf>, %67, %cst_27 [1] : vector<8x8xf32> to vector<8xf32>
    %69 = vector.shape_cast %68 : vector<8xf32> to vector<8x1xf32>
    %70 = vector.broadcast %69 : vector<8x1xf32> to vector<8x8xf32>
    %71 = arith.subf %67, %70 : vector<8x8xf32>
    %72 = math.exp %71 : vector<8x8xf32>
    %cst_28 = arith.constant dense<0.000000e+00> : vector<8xf32>
    %73 = vector.multi_reduction <add>, %72, %cst_28 [1] : vector<8x8xf32> to vector<8xf32>
    %74 = vector.shape_cast %73 : vector<8xf32> to vector<8x1xf32>
    %75 = tpu.reciprocal %74 {approx = true} : vector<8x1xf32> -> vector<8x1xf32>
    %76 = vector.broadcast %75 : vector<8x1xf32> to vector<8x8xf32>
    %77 = arith.mulf %72, %76 : vector<8x8xf32>
    %78 = arith.truncf %77 : vector<8x8xf32> to vector<8x8xbf16>
    %cst_29 = arith.constant dense<0.000000e+00> : vector<8x8xf32>
    %79 = tpu.matmul %78, %65, %cst_29 {dimension_numbers = #tpu.dot_dimension_numbers<[1], [0], [0], [1], [0, 0, 1, 1], [], []>} : vector<8x8xbf16>, vector<8x8xbf16>, vector<8x8xf32> -> vector<8x8xf32>
    %80 = arith.truncf %79 : vector<8x8xf32> to vector<8x8xbf16>
    %c1 = arith.constant 1 : index
    %c0_30 = arith.constant 0 : index
    %c0_31 = arith.constant 0 : index
    %81 = vector.load %arg6[%c1, %c0_30, %c0_31] : memref<4x8x32xbf16, #tpu.memory_space<vmem>>, vector<1x8x32xbf16>
    %82 = vector.shape_cast %81 : vector<1x8x32xbf16> to vector<8x32xbf16>
    %cst_32 = arith.constant dense<0.000000e+00> : vector<8x32xf32>
    %83 = tpu.matmul %80, %82, %cst_32 {dimension_numbers = #tpu.dot_dimension_numbers<[1], [0], [0], [1], [0, 0, 1, 1], [], []>} : vector<8x8xbf16>, vector<8x32xbf16>, vector<8x32xf32> -> vector<8x32xf32>
    %84 = arith.addf %59, %83 : vector<8x32xf32>
    %85 = vector.extract_strided_slice %31 {offsets = [0, 16], sizes = [8, 8], strides = [1, 1]} : vector<8x96xf32> to vector<8x8xf32>
    %86 = arith.truncf %85 : vector<8x8xf32> to vector<8x8xbf16>
    %87 = vector.extract_strided_slice %31 {offsets = [0, 48], sizes = [8, 8], strides = [1, 1]} : vector<8x96xf32> to vector<8x8xf32>
    %88 = arith.truncf %87 : vector<8x8xf32> to vector<8x8xbf16>
    %89 = vector.extract_strided_slice %31 {offsets = [0, 80], sizes = [8, 8], strides = [1, 1]} : vector<8x96xf32> to vector<8x8xf32>
    %90 = arith.truncf %89 : vector<8x8xf32> to vector<8x8xbf16>
    %91 = tpu.transpose %88, [1, 0] : vector<8x8xbf16> -> vector<8x8xbf16>
    %cst_33 = arith.constant dense<0.000000e+00> : vector<8x8xf32>
    %92 = tpu.matmul %86, %91, %cst_33 {dimension_numbers = #tpu.dot_dimension_numbers<[1], [0], [0], [1], [0, 0, 1, 1], [], []>} : vector<8x8xbf16>, vector<8x8xbf16>, vector<8x8xf32> -> vector<8x8xf32>
    %cst_34 = arith.constant dense<0xFF800000> : vector<8xf32>
    %93 = vector.multi_reduction <maximumf>, %92, %cst_34 [1] : vector<8x8xf32> to vector<8xf32>
    %94 = vector.shape_cast %93 : vector<8xf32> to vector<8x1xf32>
    %95 = vector.broadcast %94 : vector<8x1xf32> to vector<8x8xf32>
    %96 = arith.subf %92, %95 : vector<8x8xf32>
    %97 = math.exp %96 : vector<8x8xf32>
    %cst_35 = arith.constant dense<0.000000e+00> : vector<8xf32>
    %98 = vector.multi_reduction <add>, %97, %cst_35 [1] : vector<8x8xf32> to vector<8xf32>
    %99 = vector.shape_cast %98 : vector<8xf32> to vector<8x1xf32>
    %100 = tpu.reciprocal %99 {approx = true} : vector<8x1xf32> -> vector<8x1xf32>
    %101 = vector.broadcast %100 : vector<8x1xf32> to vector<8x8xf32>
    %102 = arith.mulf %97, %101 : vector<8x8xf32>
    %103 = arith.truncf %102 : vector<8x8xf32> to vector<8x8xbf16>
    %cst_36 = arith.constant dense<0.000000e+00> : vector<8x8xf32>
    %104 = tpu.matmul %103, %90, %cst_36 {dimension_numbers = #tpu.dot_dimension_numbers<[1], [0], [0], [1], [0, 0, 1, 1], [], []>} : vector<8x8xbf16>, vector<8x8xbf16>, vector<8x8xf32> -> vector<8x8xf32>
    %105 = arith.truncf %104 : vector<8x8xf32> to vector<8x8xbf16>
    %c2 = arith.constant 2 : index
    %c0_37 = arith.constant 0 : index
    %c0_38 = arith.constant 0 : index
    %106 = vector.load %arg6[%c2, %c0_37, %c0_38] : memref<4x8x32xbf16, #tpu.memory_space<vmem>>, vector<1x8x32xbf16>
    %107 = vector.shape_cast %106 : vector<1x8x32xbf16> to vector<8x32xbf16>
    %cst_39 = arith.constant dense<0.000000e+00> : vector<8x32xf32>
    %108 = tpu.matmul %105, %107, %cst_39 {dimension_numbers = #tpu.dot_dimension_numbers<[1], [0], [0], [1], [0, 0, 1, 1], [], []>} : vector<8x8xbf16>, vector<8x32xbf16>, vector<8x32xf32> -> vector<8x32xf32>
    %109 = arith.addf %84, %108 : vector<8x32xf32>
    %110 = vector.extract_strided_slice %31 {offsets = [0, 24], sizes = [8, 8], strides = [1, 1]} : vector<8x96xf32> to vector<8x8xf32>
    %111 = arith.truncf %110 : vector<8x8xf32> to vector<8x8xbf16>
    %112 = vector.extract_strided_slice %31 {offsets = [0, 56], sizes = [8, 8], strides = [1, 1]} : vector<8x96xf32> to vector<8x8xf32>
    %113 = arith.truncf %112 : vector<8x8xf32> to vector<8x8xbf16>
    %114 = vector.extract_strided_slice %31 {offsets = [0, 88], sizes = [8, 8], strides = [1, 1]} : vector<8x96xf32> to vector<8x8xf32>
    %115 = arith.truncf %114 : vector<8x8xf32> to vector<8x8xbf16>
    %116 = tpu.transpose %113, [1, 0] : vector<8x8xbf16> -> vector<8x8xbf16>
    %cst_40 = arith.constant dense<0.000000e+00> : vector<8x8xf32>
    %117 = tpu.matmul %111, %116, %cst_40 {dimension_numbers = #tpu.dot_dimension_numbers<[1], [0], [0], [1], [0, 0, 1, 1], [], []>} : vector<8x8xbf16>, vector<8x8xbf16>, vector<8x8xf32> -> vector<8x8xf32>
    %cst_41 = arith.constant dense<0xFF800000> : vector<8xf32>
    %118 = vector.multi_reduction <maximumf>, %117, %cst_41 [1] : vector<8x8xf32> to vector<8xf32>
    %119 = vector.shape_cast %118 : vector<8xf32> to vector<8x1xf32>
    %120 = vector.broadcast %119 : vector<8x1xf32> to vector<8x8xf32>
    %121 = arith.subf %117, %120 : vector<8x8xf32>
    %122 = math.exp %121 : vector<8x8xf32>
    %cst_42 = arith.constant dense<0.000000e+00> : vector<8xf32>
    %123 = vector.multi_reduction <add>, %122, %cst_42 [1] : vector<8x8xf32> to vector<8xf32>
    %124 = vector.shape_cast %123 : vector<8xf32> to vector<8x1xf32>
    %125 = tpu.reciprocal %124 {approx = true} : vector<8x1xf32> -> vector<8x1xf32>
    %126 = vector.broadcast %125 : vector<8x1xf32> to vector<8x8xf32>
    %127 = arith.mulf %122, %126 : vector<8x8xf32>
    %128 = arith.truncf %127 : vector<8x8xf32> to vector<8x8xbf16>
    %cst_43 = arith.constant dense<0.000000e+00> : vector<8x8xf32>
    %129 = tpu.matmul %128, %115, %cst_43 {dimension_numbers = #tpu.dot_dimension_numbers<[1], [0], [0], [1], [0, 0, 1, 1], [], []>} : vector<8x8xbf16>, vector<8x8xbf16>, vector<8x8xf32> -> vector<8x8xf32>
    %130 = arith.truncf %129 : vector<8x8xf32> to vector<8x8xbf16>
    %c3 = arith.constant 3 : index
    %c0_44 = arith.constant 0 : index
    %c0_45 = arith.constant 0 : index
    %131 = vector.load %arg6[%c3, %c0_44, %c0_45] : memref<4x8x32xbf16, #tpu.memory_space<vmem>>, vector<1x8x32xbf16>
    %132 = vector.shape_cast %131 : vector<1x8x32xbf16> to vector<8x32xbf16>
    %cst_46 = arith.constant dense<0.000000e+00> : vector<8x32xf32>
    %133 = tpu.matmul %130, %132, %cst_46 {dimension_numbers = #tpu.dot_dimension_numbers<[1], [0], [0], [1], [0, 0, 1, 1], [], []>} : vector<8x8xbf16>, vector<8x32xbf16>, vector<8x32xf32> -> vector<8x32xf32>
    %134 = arith.addf %109, %133 : vector<8x32xf32>
    %135 = arith.addf %4, %134 : vector<8x32xf32>
    %c0_47 = arith.constant 0 : index
    %c0_48 = arith.constant 0 : index
    %136 = vector.load %arg8[%c0_47, %c0_48] : memref<1x32xf32, #tpu.memory_space<vmem>>, vector<1x32xf32>
    %c0_49 = arith.constant 0 : index
    %c0_50 = arith.constant 0 : index
    %137 = vector.load %arg9[%c0_49, %c0_50] : memref<1x32xf32, #tpu.memory_space<vmem>>, vector<1x32xf32>
    %cst_51 = arith.constant dense<0.000000e+00> : vector<8xf32>
    %138 = vector.multi_reduction <add>, %135, %cst_51 [1] : vector<8x32xf32> to vector<8xf32>
    %139 = vector.shape_cast %138 : vector<8xf32> to vector<8x1xf32>
    %cst_52 = arith.constant 3.200000e+01 : f32
    %140 = vector.broadcast %cst_52 : f32 to vector<8x1xf32>
    %141 = arith.divf %139, %140 : vector<8x1xf32>
    %142 = vector.broadcast %141 : vector<8x1xf32> to vector<8x32xf32>
    %143 = arith.subf %135, %142 : vector<8x32xf32>
    %144 = arith.mulf %143, %143 : vector<8x32xf32>
    %cst_53 = arith.constant dense<0.000000e+00> : vector<8xf32>
    %145 = vector.multi_reduction <add>, %144, %cst_53 [1] : vector<8x32xf32> to vector<8xf32>
    %146 = vector.shape_cast %145 : vector<8xf32> to vector<8x1xf32>
    %cst_54 = arith.constant 3.200000e+01 : f32
    %147 = vector.broadcast %cst_54 : f32 to vector<8x1xf32>
    %148 = arith.divf %146, %147 : vector<8x1xf32>
    %149 = vector.broadcast %141 : vector<8x1xf32> to vector<8x32xf32>
    %150 = arith.subf %135, %149 : vector<8x32xf32>
    %cst_55 = arith.constant 9.99999974E-6 : f32
    %151 = vector.broadcast %cst_55 : f32 to vector<8x1xf32>
    %152 = arith.addf %148, %151 : vector<8x1xf32>
    %153 = math.rsqrt %152 : vector<8x1xf32>
    %154 = vector.broadcast %153 : vector<8x1xf32> to vector<8x32xf32>
    %155 = arith.mulf %150, %154 : vector<8x32xf32>
    %156 = vector.broadcast %136 : vector<1x32xf32> to vector<8x32xf32>
    %157 = arith.mulf %155, %156 : vector<8x32xf32>
    %158 = vector.broadcast %137 : vector<1x32xf32> to vector<8x32xf32>
    %159 = arith.addf %157, %158 : vector<8x32xf32>
    %160 = arith.truncf %159 : vector<8x32xf32> to vector<8x32xbf16>
    %c0_56 = arith.constant 0 : index
    %c0_57 = arith.constant 0 : index
    %161 = vector.load %arg10[%c0_56, %c0_57] : memref<32x128xbf16, #tpu.memory_space<vmem>>, vector<32x128xbf16>
    %cst_58 = arith.constant dense<0.000000e+00> : vector<8x128xf32>
    %162 = tpu.matmul %160, %161, %cst_58 {dimension_numbers = #tpu.dot_dimension_numbers<[1], [0], [0], [1], [0, 0, 1, 1], [], []>} : vector<8x32xbf16>, vector<32x128xbf16>, vector<8x128xf32> -> vector<8x128xf32>
    %c0_59 = arith.constant 0 : index
    %c0_60 = arith.constant 0 : index
    %163 = vector.load %arg11[%c0_59, %c0_60] : memref<1x128xf32, #tpu.memory_space<vmem>>, vector<1x128xf32>
    %164 = vector.broadcast %163 : vector<1x128xf32> to vector<8x128xf32>
    %165 = arith.addf %162, %164 : vector<8x128xf32>
    %cst_61 = arith.constant 5.000000e-01 : f32
    %166 = vector.broadcast %cst_61 : f32 to vector<8x128xf32>
    %167 = arith.mulf %166, %165 : vector<8x128xf32>
    %cst_62 = arith.constant 0.707106769 : f32
    %168 = vector.broadcast %cst_62 : f32 to vector<8x128xf32>
    %169 = arith.mulf %165, %168 : vector<8x128xf32>
    %170 = math.erf %169 : vector<8x128xf32>
    %cst_63 = arith.constant 1.000000e+00 : f32
    %171 = vector.broadcast %cst_63 : f32 to vector<8x128xf32>
    %172 = arith.addf %171, %170 : vector<8x128xf32>
    %173 = arith.mulf %167, %172 : vector<8x128xf32>
    %174 = arith.truncf %173 : vector<8x128xf32> to vector<8x128xbf16>
    %c0_64 = arith.constant 0 : index
    %c0_65 = arith.constant 0 : index
    %175 = vector.load %arg12[%c0_64, %c0_65] : memref<128x32xbf16, #tpu.memory_space<vmem>>, vector<128x32xbf16>
    %cst_66 = arith.constant dense<0.000000e+00> : vector<8x32xf32>
    %176 = tpu.matmul %174, %175, %cst_66 {dimension_numbers = #tpu.dot_dimension_numbers<[1], [0], [0], [1], [0, 0, 1, 1], [], []>} : vector<8x128xbf16>, vector<128x32xbf16>, vector<8x32xf32> -> vector<8x32xf32>
    %c0_67 = arith.constant 0 : index
    %c0_68 = arith.constant 0 : index
    %177 = vector.load %arg13[%c0_67, %c0_68] : memref<1x32xf32, #tpu.memory_space<vmem>>, vector<1x32xf32>
    %178 = vector.broadcast %177 : vector<1x32xf32> to vector<8x32xf32>
    %179 = arith.addf %176, %178 : vector<8x32xf32>
    %180 = arith.addf %135, %179 : vector<8x32xf32>
    %c0_69 = arith.constant 0 : index
    %c0_70 = arith.constant 0 : index
    %c0_71 = arith.constant 0 : index
    %181 = vector.load %arg14[%c0_69, %c0_70, %c0_71] : memref<1x8x32xf32, #tpu.memory_space<vmem>>, vector<1x8x32xf32>
    %182 = vector.shape_cast %181 : vector<1x8x32xf32> to vector<8x32xf32>
    %183 = vector.shape_cast %180 : vector<8x32xf32> to vector<1x8x32xf32>
    tpu.vector_store %arg14[%c0_69, %c0_70, %c0_71], %183 {strides = array<i32>} : memref<1x8x32xf32, #tpu.memory_space<vmem>>, vector<1x8x32xf32>,
    return
  }
  func.func @transform_0(%arg0: i32) -> (i32, i32, i32) {
    %c0_i32 = arith.constant 0 : i32
    %c0_i32_0 = arith.constant 0 : i32
    %c0_i32_1 = arith.constant 0 : i32
    return %arg0, %c0_i32, %c0_i32_0 : i32, i32, i32
  }
  func.func @transform_1(%arg0: i32) -> (i32, i32, i32) {
    %c0_i32 = arith.constant 0 : i32
    %c0_i32_0 = arith.constant 0 : i32
    %c0_i32_1 = arith.constant 0 : i32
    return %arg0, %c0_i32, %c0_i32_0 : i32, i32, i32
  }
  func.func @transform_2(%arg0: i32) -> (i32, i32) {
    %c0_i32 = arith.constant 0 : i32
    %c0_i32_0 = arith.constant 0 : i32
    %c0_i32_1 = arith.constant 0 : i32
    return %c0_i32, %c0_i32_0 : i32, i32
  }
  func.func @transform_3(%arg0: i32) -> (i32, i32) {
    %c0_i32 = arith.constant 0 : i32
    %c0_i32_0 = arith.constant 0 : i32
    %c0_i32_1 = arith.constant 0 : i32
    return %c0_i32, %c0_i32_0 : i32, i32
  }
  func.func @transform_4(%arg0: i32) -> (i32, i32) {
    %c0_i32 = arith.constant 0 : i32
    %c0_i32_0 = arith.constant 0 : i32
    %c0_i32_1 = arith.constant 0 : i32
    return %c0_i32, %c0_i32_0 : i32, i32
  }
  func.func @transform_5(%arg0: i32) -> (i32, i32, i32) {
    %c0_i32 = arith.constant 0 : i32
    %c0_i32_0 = arith.constant 0 : i32
    %c0_i32_1 = arith.constant 0 : i32
    %c0_i32_2 = arith.constant 0 : i32
    return %c0_i32, %c0_i32_0, %c0_i32_1 : i32, i32, i32
  }
  func.func @transform_6(%arg0: i32) -> (i32, i32) {
    %c0_i32 = arith.constant 0 : i32
    %c0_i32_0 = arith.constant 0 : i32
    %c0_i32_1 = arith.constant 0 : i32
    return %c0_i32, %c0_i32_0 : i32, i32
  }
  func.func @transform_7(%arg0: i32) -> (i32, i32) {
    %c0_i32 = arith.constant 0 : i32
    %c0_i32_0 = arith.constant 0 : i32
    %c0_i32_1 = arith.constant 0 : i32
    return %c0_i32, %c0_i32_0 : i32, i32
  }
  func.func @transform_8(%arg0: i32) -> (i32, i32) {
    %c0_i32 = arith.constant 0 : i32
    %c0_i32_0 = arith.constant 0 : i32
    %c0_i32_1 = arith.constant 0 : i32
    return %c0_i32, %c0_i32_0 : i32, i32
  }
  func.func @transform_9(%arg0: i32) -> (i32, i32) {
    %c0_i32 = arith.constant 0 : i32
    %c0_i32_0 = arith.constant 0 : i32
    %c0_i32_1 = arith.constant 0 : i32
    return %c0_i32, %c0_i32_0 : i32, i32
  }
  func.func @transform_10(%arg0: i32) -> (i32, i32) {
    %c0_i32 = arith.constant 0 : i32
    %c0_i32_0 = arith.constant 0 : i32
    %c0_i32_1 = arith.constant 0 : i32
    return %c0_i32, %c0_i32_0 : i32, i32
  }
  func.func @transform_11(%arg0: i32) -> (i32, i32) {
    %c0_i32 = arith.constant 0 : i32
    %c0_i32_0 = arith.constant 0 : i32
    %c0_i32_1 = arith.constant 0 : i32
    return %c0_i32, %c0_i32_0 : i32, i32
  }
  func.func @transform_12(%arg0: i32) -> (i32, i32) {
    %c0_i32 = arith.constant 0 : i32
    %c0_i32_0 = arith.constant 0 : i32
    %c0_i32_1 = arith.constant 0 : i32
    return %c0_i32, %c0_i32_0 : i32, i32
  }
  func.func @transform_13(%arg0: i32) -> (i32, i32, i32) {
    %c0_i32 = arith.constant 0 : i32
    %c0_i32_0 = arith.constant 0 : i32
    %c0_i32_1 = arith.constant 0 : i32
    return %arg0, %c0_i32, %c0_i32_0 : i32, i32, i32
  }
}

</mosaic_0001>

<llo_original>
// kernel: tpu_custom_call.1
$region0: #{tpu_custom_call.1}
  #allocation0 [shape = 'u32[]', space=smem, size = 0x4, offset = 0x4, fixed_abs, tag = 'smem constant byte address 0x4 - core index']
  #allocation1 [shape = 'u32[144,128]{1,0:T(1,128)}', space=vmem, size = 0x12000, scoped, tag = 'internal scratch']
  %s0 = inlined_call_operand.vmem [shape: f32[2,8,32], index: 0, kind: input, shape index: {}]
  %s1 = inlined_call_operand.vmem [shape: f32[2,8,32], index: 1, kind: input, shape index: {}]
  %s2 = inlined_call_operand.vmem [shape: f32[1,32], index: 2, kind: input, shape index: {}]
  %s3 = inlined_call_operand.vmem [shape: f32[1,32], index: 3, kind: input, shape index: {}]
  %s4 = inlined_call_operand.vmem [shape: bf16[32,96], index: 4, kind: input, shape index: {}]
  %s5 = inlined_call_operand.vmem [shape: bf16[4,8,32], index: 5, kind: input, shape index: {}]
  %s6 = inlined_call_operand.vmem [shape: f32[1,32], index: 6, kind: input, shape index: {}]
  %s7 = inlined_call_operand.vmem [shape: f32[1,32], index: 7, kind: input, shape index: {}]
  %s8 = inlined_call_operand.hbm [shape: f32[1,32], index: 8, kind: input, shape index: {}]
  %s9 = inlined_call_operand.vmem [shape: bf16[32,128], index: 9, kind: input, shape index: {}]
  %s10 = inlined_call_operand.hbm [shape: f32[1,128], index: 10, kind: input, shape index: {}]
  %s11 = inlined_call_operand.vmem [shape: bf16[128,32], index: 11, kind: input, shape index: {}]
  %s12 = inlined_call_operand.vmem [shape: f32[1,32], index: 12, kind: input, shape index: {}]
  %s13 = inlined_call_operand.hbm [shape: f32[2,8,32], index: 13, kind: output, shape index: {}]
  %s14 = sld [smem:[#allocation0]]
  $region93: #{tpu_custom_call.1} parent=0
    _
  %s16 = ssub.s32 1, %s14
  %s17 = scalar_select 0, %s16, %s14
  $region1: #{tpu_custom_call.1} parent=0
    #allocation2 [shape = 'u8[512]{0}', space=vmem, size = 0x400, scoped, tag = 'input window, operand 8, single buffered']
    #allocation3 [shape = 's32[2]{0}', space=sflag, size = 0x8, scoped, tag = 'scoped memory for tpu_custom_call.1']
    #allocation4 [shape = 's32[2]{0}', space=sflag, size = 0x8, scoped, tag = 'scoped memory for tpu_custom_call.1']
    #allocation5 [shape = 'u8[512]{0}', space=vmem, size = 0x400, scoped, tag = 'input window, operand 10, single buffered']
    #allocation6 [shape = 's32[1]{0}', space=sflag, size = 0x4, scoped, tag = 'scoped memory for tpu_custom_call.1']
    #allocation7 [shape = 'u8[8192]{0}', space=vmem, size = 0x2000, scoped, tag = 'output window, operand 0']
    %18 = vsyncpa [#allocation3], 0
    %19 = vsyncpa [#allocation6], 0
    %20 = vsyncpa [#allocation4], 0
    %s21 = scalar_lea.sflag [#allocation4], 1
    %22 = vsyncpa %s21, 0
    loop: start=0, step=1, limit=4
    $region2: #{tpu_custom_call.1} parent=1 // loop_pre_header
      _
    $region3: #{tpu_custom_call.1} parent=1 // loop_header
      %s24 = sphi 0, %s28
      %p25 = scmp.ge.s32.totalorder %s24, 4
      %s34 = sphi 0, %s36
      %s37 = sphi 0, %s34
      %s38 = sphi 0, %s37
      %s54 = sphi 0, %s38
      %s60 = sphi 0, %s62
      %s63 = sphi 0, %s60
      %s64 = sphi 0, %s63
      %s80 = sphi 0, %s64
      %s84 = sphi 0, %s84
      %s86 = sphi 0, %s84
      %s87 = sphi 0, %s86
      %s101 = sphi 0, %s87
      %s105 = sphi 0, %s105
      %s107 = sphi 0, %s105
      %s108 = sphi 0, %s107
      %s122 = sphi 0, %s108
      %s126 = sphi 0, %s126
      %s128 = sphi 0, %s126
      %s129 = sphi 0, %s128
      %s143 = sphi 0, %s129
      %s147 = sphi 0, %s147
      %s149 = sphi 0, %s147
      %s150 = sphi 0, %s149
      %s164 = sphi 0, %s150
      %s168 = sphi 0, %s168
      %s170 = sphi 0, %s168
      %s171 = sphi 0, %s170
      %s185 = sphi 0, %s171
      %s189 = sphi 0, %s189
      %s191 = sphi 0, %s189
      %s192 = sphi 0, %s191
      %s206 = sphi 0, %s192
      %s210 = sphi 0, %s210
      %s212 = sphi 0, %s210
      %s213 = sphi 0, %s212
      %s227 = sphi 0, %s213
      %s231 = sphi 0, %s231
      %s233 = sphi 0, %s231
      %s234 = sphi 0, %s233
      %s248 = sphi 0, %s234
      %s252 = sphi 0, %s252
      %s254 = sphi 0, %s252
      %s255 = sphi 0, %s254
      %s269 = sphi 0, %s255
      %s273 = sphi 0, %s273
      %s275 = sphi 0, %s273
      %s276 = sphi 0, %s275
      %s290 = sphi 0, %s276
      %s294 = sphi 0, %s294
      %s296 = sphi 0, %s294
      %s297 = sphi 0, %s296
      %s311 = sphi 0, %s297
      %s317 = sphi 0, %s319
      %s320 = sphi 0, %s317
      %s321 = sphi 0, %s320
      %s337 = sphi 0, %s321
    $region4: #{tpu_custom_call.1} parent=1 // loop_header_branch
      %27 = sbr.rel (%p25) target = $region8
    $region5: #{tpu_custom_call.1} parent=1 // loop_body
      %s29 = ssub.s32 %s24, 1
      %s30 = ssub.s32 %s24, 2
      %s31 = sadd.s32 %s24, 1
      %s32 = ssub.s32 %s24, %s31
      %p33 = scmp.eq.s32.totalorder %s32, 0
      %s35 = sadd.s32 %s34, 1
      %s36 = scalar_select %p33, %s34, %s35
      %p39 = pneg %p33
      %p40 = scmp.eq.s32.totalorder %s24, 1
      %p41 = por %p39, %p40
      %p42 = scmp.ne.s32.totalorder %s34, %s37
      %p43 = scmp.eq.s32.totalorder %s24, 0
      %p44 = por %p42, %p43
      %p45 = scmp.ne.s32.totalorder %s34, %s37
      %p46 = scmp.eq.s32.totalorder %s29, 1
      %p47 = por %p45, %p46
      %p48 = scmp.ne.s32.totalorder %s37, %s38
      %p49 = scmp.eq.s32.totalorder %s29, 0
      %p50 = por %p48, %p49
      %p51 = scmp.ne.s32.totalorder %s37, %s38
      %p52 = scmp.eq.s32.totalorder %s30, 1
      %p53 = por %p51, %p52
      %p55 = scmp.ne.s32.totalorder %s38, %s54
      %p56 = scmp.eq.s32.totalorder %s30, 0
      %p57 = por %p55, %p56
      %s58 = ssub.s32 %s24, %s31
      %p59 = scmp.eq.s32.totalorder %s58, 0
      %s61 = sadd.s32 %s60, 1
      %s62 = scalar_select %p59, %s60, %s61
      %p65 = pneg %p59
      %p66 = scmp.eq.s32.totalorder %s24, 1
      %p67 = por %p65, %p66
      %p68 = scmp.ne.s32.totalorder %s60, %s63
      %p69 = scmp.eq.s32.totalorder %s24, 0
      %p70 = por %p68, %p69
      %p71 = scmp.ne.s32.totalorder %s60, %s63
      %p72 = scmp.eq.s32.totalorder %s29, 1
      %p73 = por %p71, %p72
      %p74 = scmp.ne.s32.totalorder %s63, %s64
      %p75 = scmp.eq.s32.totalorder %s29, 0
      %p76 = por %p74, %p75
      %p77 = scmp.ne.s32.totalorder %s63, %s64
      %p78 = scmp.eq.s32.totalorder %s30, 1
      %p79 = por %p77, %p78
      %p81 = scmp.ne.s32.totalorder %s64, %s80
      %p82 = scmp.eq.s32.totalorder %s30, 0
      %p83 = por %p81, %p82
      %s85 = sadd.s32 %s84, 1
      %p88 = scmp.eq.s32.totalorder %s24, 1
      %p89 = scmp.ne.s32.totalorder %s84, %s86
      %p90 = scmp.eq.s32.totalorder %s24, 0
      %p91 = por %p89, %p90
      %p92 = scmp.ne.s32.totalorder %s84, %s86
      %p93 = scmp.eq.s32.totalorder %s29, 1
      %p94 = por %p92, %p93
      %p95 = scmp.ne.s32.totalorder %s86, %s87
      %p96 = scmp.eq.s32.totalorder %s29, 0
      %p97 = por %p95, %p96
      %p98 = scmp.ne.s32.totalorder %s86, %s87
      %p99 = scmp.eq.s32.totalorder %s30, 1
      %p100 = por %p98, %p99
      %p102 = scmp.ne.s32.totalorder %s87, %s101
      %p103 = scmp.eq.s32.totalorder %s30, 0
      %p104 = por %p102, %p103
      %s106 = sadd.s32 %s105, 1
      %p109 = scmp.eq.s32.totalorder %s24, 1
      %p110 = scmp.ne.s32.totalorder %s105, %s107
      %p111 = scmp.eq.s32.totalorder %s24, 0
      %p112 = por %p110, %p111
      %p113 = scmp.ne.s32.totalorder %s105, %s107
      %p114 = scmp.eq.s32.totalorder %s29, 1
      %p115 = por %p113, %p114
      %p116 = scmp.ne.s32.totalorder %s107, %s108
      %p117 = scmp.eq.s32.totalorder %s29, 0
      %p118 = por %p116, %p117
      %p119 = scmp.ne.s32.totalorder %s107, %s108
      %p120 = scmp.eq.s32.totalorder %s30, 1
      %p121 = por %p119, %p120
      %p123 = scmp.ne.s32.totalorder %s108, %s122
      %p124 = scmp.eq.s32.totalorder %s30, 0
      %p125 = por %p123, %p124
      %s127 = sadd.s32 %s126, 1
      %p130 = scmp.eq.s32.totalorder %s24, 1
      %p131 = scmp.ne.s32.totalorder %s126, %s128
      %p132 = scmp.eq.s32.totalorder %s24, 0
      %p133 = por %p131, %p132
      %p134 = scmp.ne.s32.totalorder %s126, %s128
      %p135 = scmp.eq.s32.totalorder %s29, 1
      %p136 = por %p134, %p135
      %p137 = scmp.ne.s32.totalorder %s128, %s129
      %p138 = scmp.eq.s32.totalorder %s29, 0
      %p139 = por %p137, %p138
      %p140 = scmp.ne.s32.totalorder %s128, %s129
      %p141 = scmp.eq.s32.totalorder %s30, 1
      %p142 = por %p140, %p141
      %p144 = scmp.ne.s32.totalorder %s129, %s143
      %p145 = scmp.eq.s32.totalorder %s30, 0
      %p146 = por %p144, %p145
      %s148 = sadd.s32 %s147, 1
      %p151 = scmp.eq.s32.totalorder %s24, 1
      %p152 = scmp.ne.s32.totalorder %s147, %s149
      %p153 = scmp.eq.s32.totalorder %s24, 0
      %p154 = por %p152, %p153
      %p155 = scmp.ne.s32.totalorder %s147, %s149
      %p156 = scmp.eq.s32.totalorder %s29, 1
      %p157 = por %p155, %p156
      %p158 = scmp.ne.s32.totalorder %s149, %s150
      %p159 = scmp.eq.s32.totalorder %s29, 0
      %p160 = por %p158, %p159
      %p161 = scmp.ne.s32.totalorder %s149, %s150
      %p162 = scmp.eq.s32.totalorder %s30, 1
      %p163 = por %p161, %p162
      %p165 = scmp.ne.s32.totalorder %s150, %s164
      %p166 = scmp.eq.s32.totalorder %s30, 0
      %p167 = por %p165, %p166
      %s169 = sadd.s32 %s168, 1
      %p172 = scmp.eq.s32.totalorder %s24, 1
      %p173 = scmp.ne.s32.totalorder %s168, %s170
      %p174 = scmp.eq.s32.totalorder %s24, 0
      %p175 = por %p173, %p174
      %p176 = scmp.ne.s32.totalorder %s168, %s170
      %p177 = scmp.eq.s32.totalorder %s29, 1
      %p178 = por %p176, %p177
      %p179 = scmp.ne.s32.totalorder %s170, %s171
      %p180 = scmp.eq.s32.totalorder %s29, 0
      %p181 = por %p179, %p180
      %p182 = scmp.ne.s32.totalorder %s170, %s171
      %p183 = scmp.eq.s32.totalorder %s30, 1
      %p184 = por %p182, %p183
      %p186 = scmp.ne.s32.totalorder %s171, %s185
      %p187 = scmp.eq.s32.totalorder %s30, 0
      %p188 = por %p186, %p187
      %s190 = sadd.s32 %s189, 1
      %p193 = scmp.eq.s32.totalorder %s24, 1
      %p194 = scmp.ne.s32.totalorder %s189, %s191
      %p195 = scmp.eq.s32.totalorder %s24, 0
      %p196 = por %p194, %p195
      %p197 = scmp.ne.s32.totalorder %s189, %s191
      %p198 = scmp.eq.s32.totalorder %s29, 1
      %p199 = por %p197, %p198
      %p200 = scmp.ne.s32.totalorder %s191, %s192
      %p201 = scmp.eq.s32.totalorder %s29, 0
      %p202 = por %p200, %p201
      %p203 = scmp.ne.s32.totalorder %s191, %s192
      %p204 = scmp.eq.s32.totalorder %s30, 1
      %p205 = por %p203, %p204
      %p207 = scmp.ne.s32.totalorder %s192, %s206
      %p208 = scmp.eq.s32.totalorder %s30, 0
      %p209 = por %p207, %p208
      %s211 = sadd.s32 %s210, 1
      %p214 = scmp.eq.s32.totalorder %s24, 1
      %p215 = scmp.ne.s32.totalorder %s210, %s212
      %p216 = scmp.eq.s32.totalorder %s24, 0
      %p217 = por %p215, %p216
      %p218 = scmp.ne.s32.totalorder %s210, %s212
      %p219 = scmp.eq.s32.totalorder %s29, 1
      %p220 = por %p218, %p219
      %p221 = scmp.ne.s32.totalorder %s212, %s213
      %p222 = scmp.eq.s32.totalorder %s29, 0
      %p223 = por %p221, %p222
      %p224 = scmp.ne.s32.totalorder %s212, %s213
      %p225 = scmp.eq.s32.totalorder %s30, 1
      %p226 = por %p224, %p225
      %p228 = scmp.ne.s32.totalorder %s213, %s227
      %p229 = scmp.eq.s32.totalorder %s30, 0
      %p230 = por %p228, %p229
      %s232 = sadd.s32 %s231, 1
      %p235 = scmp.eq.s32.totalorder %s24, 1
      %p236 = scmp.ne.s32.totalorder %s231, %s233
      %p237 = scmp.eq.s32.totalorder %s24, 0
      %p238 = por %p236, %p237
      %p239 = scmp.ne.s32.totalorder %s231, %s233
      %p240 = scmp.eq.s32.totalorder %s29, 1
      %p241 = por %p239, %p240
      %p242 = scmp.ne.s32.totalorder %s233, %s234
      %p243 = scmp.eq.s32.totalorder %s29, 0
      %p244 = por %p242, %p243
      %p245 = scmp.ne.s32.totalorder %s233, %s234
      %p246 = scmp.eq.s32.totalorder %s30, 1
      %p247 = por %p245, %p246
      %p249 = scmp.ne.s32.totalorder %s234, %s248
      %p250 = scmp.eq.s32.totalorder %s30, 0
      %p251 = por %p249, %p250
      %s253 = sadd.s32 %s252, 1
      %p256 = scmp.eq.s32.totalorder %s24, 1
      %p257 = scmp.ne.s32.totalorder %s252, %s254
      %p258 = scmp.eq.s32.totalorder %s24, 0
      %p259 = por %p257, %p258
      %p260 = scmp.ne.s32.totalorder %s252, %s254
      %p261 = scmp.eq.s32.totalorder %s29, 1
      %p262 = por %p260, %p261
      %p263 = scmp.ne.s32.totalorder %s254, %s255
      %p264 = scmp.eq.s32.totalorder %s29, 0
      %p265 = por %p263, %p264
      %p266 = scmp.ne.s32.totalorder %s254, %s255
      %p267 = scmp.eq.s32.totalorder %s30, 1
      %p268 = por %p266, %p267
      %p270 = scmp.ne.s32.totalorder %s255, %s269
      %p271 = scmp.eq.s32.totalorder %s30, 0
      %p272 = por %p270, %p271
      %s274 = sadd.s32 %s273, 1
      %p277 = scmp.eq.s32.totalorder %s24, 1
      %p278 = scmp.ne.s32.totalorder %s273, %s275
      %p279 = scmp.eq.s32.totalorder %s24, 0
      %p280 = por %p278, %p279
      %p281 = scmp.ne.s32.totalorder %s273, %s275
      %p282 = scmp.eq.s32.totalorder %s29, 1
      %p283 = por %p281, %p282
      %p284 = scmp.ne.s32.totalorder %s275, %s276
      %p285 = scmp.eq.s32.totalorder %s29, 0
      %p286 = por %p284, %p285
      %p287 = scmp.ne.s32.totalorder %s275, %s276
      %p288 = scmp.eq.s32.totalorder %s30, 1
      %p289 = por %p287, %p288
      %p291 = scmp.ne.s32.totalorder %s276, %s290
      %p292 = scmp.eq.s32.totalorder %s30, 0
      %p293 = por %p291, %p292
      %s295 = sadd.s32 %s294, 1
      %p298 = scmp.eq.s32.totalorder %s24, 1
      %p299 = scmp.ne.s32.totalorder %s294, %s296
      %p300 = scmp.eq.s32.totalorder %s24, 0
      %p301 = por %p299, %p300
      %p302 = scmp.ne.s32.totalorder %s294, %s296
      %p303 = scmp.eq.s32.totalorder %s29, 1
      %p304 = por %p302, %p303
      %p305 = scmp.ne.s32.totalorder %s296, %s297
      %p306 = scmp.eq.s32.totalorder %s29, 0
      %p307 = por %p305, %p306
      %p308 = scmp.ne.s32.totalorder %s296, %s297
      %p309 = scmp.eq.s32.totalorder %s30, 1
      %p310 = por %p308, %p309
      %p312 = scmp.ne.s32.totalorder %s297, %s311
      %p313 = scmp.eq.s32.totalorder %s30, 0
      %p314 = por %p312, %p313
      %s315 = ssub.s32 %s24, %s31
      %p316 = scmp.eq.s32.totalorder %s315, 0
      %s318 = sadd.s32 %s317, 1
      %s319 = scalar_select %p316, %s317, %s318
      %p322 = pneg %p316
      %p323 = scmp.eq.s32.totalorder %s24, 1
      %p324 = por %p322, %p323
      %p325 = scmp.ne.s32.totalorder %s317, %s320
      %p326 = scmp.eq.s32.totalorder %s24, 0
      %p327 = por %p325, %p326
      %p328 = scmp.ne.s32.totalorder %s317, %s320
      %p329 = scmp.eq.s32.totalorder %s29, 1
      %p330 = por %p328, %p329
      %p331 = scmp.ne.s32.totalorder %s320, %s321
      %p332 = scmp.eq.s32.totalorder %s29, 0
      %p333 = por %p331, %p332
      %p334 = scmp.ne.s32.totalorder %s320, %s321
      %p335 = scmp.eq.s32.totalorder %s30, 1
      %p336 = por %p334, %p335
      %p338 = scmp.ne.s32.totalorder %s321, %s337
      %p339 = scmp.eq.s32.totalorder %s30, 0
      %p340 = por %p338, %p339
      %p341 = scmp.le.s32.totalorder 1, %s24
      %p342 = scmp.lt.s32.totalorder %s24, 3
      %p343 = pnand %p341, %p342
      %p344 = pneg %p343
      // Predicated region
      $region9: #{tpu_custom_call.1} parent=5 // pred_check
        _
      $region10: #{tpu_custom_call.1} parent=5 // pred_check_branch
        %346 = sbr.rel (%p343) target = $region12
      $region11: #{tpu_custom_call.1} parent=5 // pred_region
        %s347 = ssub.s32 %s24, 1
        // Predicated region
        $region13: #{tpu_custom_call.1} parent=11 // pred_check
          %p348 = pneg %p97
        $region14: #{tpu_custom_call.1} parent=11 // pred_check_branch
          %350 = sbr.rel (%p348) target = $region16
        $region15: #{tpu_custom_call.1} parent=11 // pred_region
          _
        $region16: #{tpu_custom_call.1} parent=11 // pred_fallthru
          _
        // Predicated region
        $region17: #{tpu_custom_call.1} parent=11 // pred_check
          %p351 = pneg %p118
        $region18: #{tpu_custom_call.1} parent=11 // pred_check_branch
          %353 = sbr.rel (%p351) target = $region20
        $region19: #{tpu_custom_call.1} parent=11 // pred_region
          _
        $region20: #{tpu_custom_call.1} parent=11 // pred_fallthru
          _
        // Predicated region
        $region21: #{tpu_custom_call.1} parent=11 // pred_check
          %p354 = pneg %p139
        $region22: #{tpu_custom_call.1} parent=11 // pred_check_branch
          %356 = sbr.rel (%p354) target = $region24
        $region23: #{tpu_custom_call.1} parent=11 // pred_region
          _
        $region24: #{tpu_custom_call.1} parent=11 // pred_fallthru
          _
        // Predicated region
        $region25: #{tpu_custom_call.1} parent=11 // pred_check
          %p357 = pneg %p160
        $region26: #{tpu_custom_call.1} parent=11 // pred_check_branch
          %359 = sbr.rel (%p357) target = $region28
        $region27: #{tpu_custom_call.1} parent=11 // pred_region
          _
        $region28: #{tpu_custom_call.1} parent=11 // pred_fallthru
          _
        // Predicated region
        $region29: #{tpu_custom_call.1} parent=11 // pred_check
          %p360 = pneg %p181
        $region30: #{tpu_custom_call.1} parent=11 // pred_check_branch
          %362 = sbr.rel (%p360) target = $region32
        $region31: #{tpu_custom_call.1} parent=11 // pred_region
          _
        $region32: #{tpu_custom_call.1} parent=11 // pred_fallthru
          _
        // Predicated region
        $region33: #{tpu_custom_call.1} parent=11 // pred_check
          %p363 = pneg %p202
        $region34: #{tpu_custom_call.1} parent=11 // pred_check_branch
          %365 = sbr.rel (%p363) target = $region36
        $region35: #{tpu_custom_call.1} parent=11 // pred_region
          _
        $region36: #{tpu_custom_call.1} parent=11 // pred_fallthru
          _
        // Predicated region
        $region37: #{tpu_custom_call.1} parent=11 // pred_check
          %p366 = pneg %p223
        $region38: #{tpu_custom_call.1} parent=11 // pred_check_branch
          %368 = sbr.rel (%p366) target = $region40
        $region39: #{tpu_custom_call.1} parent=11 // pred_region
          %s370 = ssub.s32 16, 16
          %371 = vsyncadd [#allocation3], %s370
          %s373 = sshll.u32 [#allocation2], 4
          %s374 = int_to_ptr.vmem [resolvable:$true] %s373
          %376 = dma.hbm_to_vmem [thread:$0]  %s8, 16, %s374, [#allocation3]
        $region40: #{tpu_custom_call.1} parent=11 // pred_fallthru
          _
        // Predicated region
        $region41: #{tpu_custom_call.1} parent=11 // pred_check
          %p377 = pneg %p244
        $region42: #{tpu_custom_call.1} parent=11 // pred_check_branch
          %379 = sbr.rel (%p377) target = $region44
        $region43: #{tpu_custom_call.1} parent=11 // pred_region
          _
        $region44: #{tpu_custom_call.1} parent=11 // pred_fallthru
          _
        // Predicated region
        $region45: #{tpu_custom_call.1} parent=11 // pred_check
          %p380 = pneg %p265
        $region46: #{tpu_custom_call.1} parent=11 // pred_check_branch
          %382 = sbr.rel (%p380) target = $region48
        $region47: #{tpu_custom_call.1} parent=11 // pred_region
          %s384 = ssub.s32 16, 16
          %385 = vsyncadd [#allocation6], %s384
          %s387 = sshll.u32 [#allocation5], 4
          %s388 = int_to_ptr.vmem [resolvable:$true] %s387
          %390 = dma.hbm_to_vmem [thread:$0]  %s10, 16, %s388, [#allocation6]
        $region48: #{tpu_custom_call.1} parent=11 // pred_fallthru
          _
        // Predicated region
        $region49: #{tpu_custom_call.1} parent=11 // pred_check
          %p391 = pneg %p286
        $region50: #{tpu_custom_call.1} parent=11 // pred_check_branch
          %393 = sbr.rel (%p391) target = $region52
        $region51: #{tpu_custom_call.1} parent=11 // pred_region
          _
        $region52: #{tpu_custom_call.1} parent=11 // pred_fallthru
          _
        // Predicated region
        $region53: #{tpu_custom_call.1} parent=11 // pred_check
          %p394 = pneg %p307
        $region54: #{tpu_custom_call.1} parent=11 // pred_check_branch
          %396 = sbr.rel (%p394) target = $region56
        $region55: #{tpu_custom_call.1} parent=11 // pred_region
          _
        $region56: #{tpu_custom_call.1} parent=11 // pred_fallthru
          _
      $region12: #{tpu_custom_call.1} parent=5 // pred_fallthru
        _
      %p397 = scmp.lt.s32.totalorder %s24, 2
      // Predicated region
      $region57: #{tpu_custom_call.1} parent=5 // pred_check
        %p398 = pneg %p397
      $region58: #{tpu_custom_call.1} parent=5 // pred_check_branch
        %400 = sbr.rel (%p398) target = $region60
      $region59: #{tpu_custom_call.1} parent=5 // pred_region
        // Predicated region
        $region61: #{tpu_custom_call.1} parent=59 // pred_check
          %p401 = pneg %p44
        $region62: #{tpu_custom_call.1} parent=59 // pred_check_branch
          %403 = sbr.rel (%p401) target = $region64
        $region63: #{tpu_custom_call.1} parent=59 // pred_region
          %p404 = scmp.lt.s32.totalorder %s24, 1
          %s405 = scalar_select %p404, %s24, 1
          %s406 = smul.addr %s405, 8
          %s407 = scalar_lea.vmem %s0, %s406
        $region64: #{tpu_custom_call.1} parent=59 // pred_fallthru
          _
        // Predicated region
        $region65: #{tpu_custom_call.1} parent=59 // pred_check
          %p408 = pneg %p70
        $region66: #{tpu_custom_call.1} parent=59 // pred_check_branch
          %410 = sbr.rel (%p408) target = $region68
        $region67: #{tpu_custom_call.1} parent=59 // pred_region
          %p411 = scmp.lt.s32.totalorder %s24, 1
          %s412 = scalar_select %p411, %s24, 1
          %s413 = smul.addr %s412, 8
          %s414 = scalar_lea.vmem %s1, %s413
        $region68: #{tpu_custom_call.1} parent=59 // pred_fallthru
          _
      $region60: #{tpu_custom_call.1} parent=5 // pred_fallthru
        _
      %p415 = scmp.le.s32.totalorder 1, %s24
      %p416 = scmp.lt.s32.totalorder %s24, 3
      %p417 = pnand %p415, %p416
      %p418 = pneg %p417
      // Predicated region
      $region69: #{tpu_custom_call.1} parent=5 // pred_check
        _
      $region70: #{tpu_custom_call.1} parent=5 // pred_check_branch
        %420 = sbr.rel (%p417) target = $region72
      $region71: #{tpu_custom_call.1} parent=5 // pred_region
        %s421 = ssub.s32 %s24, 1
        // Predicated region
        $region73: #{tpu_custom_call.1} parent=71 // pred_check
          %p422 = pneg %p223
        $region74: #{tpu_custom_call.1} parent=71 // pred_check_branch
          %424 = sbr.rel (%p422) target = $region76
        $region75: #{tpu_custom_call.1} parent=71 // pred_region
          %425 = dma.done [#allocation3], 16
        $region76: #{tpu_custom_call.1} parent=71 // pred_fallthru
          _
        // Predicated region
        $region77: #{tpu_custom_call.1} parent=71 // pred_check
          %p426 = pneg %p265
        $region78: #{tpu_custom_call.1} parent=71 // pred_check_branch
          %428 = sbr.rel (%p426) target = $region80
        $region79: #{tpu_custom_call.1} parent=71 // pred_region
          %429 = dma.done [#allocation6], 16
        $region80: #{tpu_custom_call.1} parent=71 // pred_fallthru
          _
        %p430 = scmp.lt.s32.totalorder %s29, 1
        %s431 = scalar_select %p430, %s29, 1
        %s432 = smul.addr %s431, 8
        %s433 = scalar_lea.vmem %s0, %s432
        %p434 = pneg %p50
        %p435 = pneg %p47
        %p436 = scmp.lt.s32.totalorder %s29, 1
        %s437 = scalar_select %p436, %s29, 1
        %s438 = smul.addr %s437, 8
        %s439 = scalar_lea.vmem %s1, %s438
        %p440 = pneg %p76
        %p441 = pneg %p73
        %p442 = pneg %p97
        %p443 = pneg %p94
        %p444 = pneg %p118
        %p445 = pneg %p115
        %p446 = pneg %p139
        %p447 = pneg %p136
        %p448 = pneg %p160
        %p449 = pneg %p157
        %p450 = pneg %p181
        %p451 = pneg %p178
        %p452 = pneg %p202
        %p453 = pneg %p199
        %p454 = pneg %p223
        %p455 = pneg %p220
        %p456 = pneg %p244
        %p457 = pneg %p241
        %p458 = pneg %p265
        %p459 = pneg %p262
        %p460 = pneg %p286
        %p461 = pneg %p283
        %p462 = pneg %p307
        %p463 = pneg %p304
        %p464 = pneg %p333
        %p465 = pneg %p330
        %s466 = sand.u32 %s320, 1
        %s467 = scalar_lea.sflag [#allocation4], %s466
        %s468 = sand.u32 %s320, 1
        %s469 = smul.addr %s468, 8
        %s470 = scalar_lea.vmem [#allocation7], %s469
        %p471 = scmp.lt.s32.totalorder %s29, 1
        %s472 = scalar_select %p471, %s29, 1
        %s473 = smul.addr %s472, 8
        %s474 = scalar_lea.vmem %s0, %s473
        %p475 = scmp.lt.s32.totalorder %s29, 1
        %s476 = scalar_select %p475, %s29, 1
        %s477 = smul.addr %s476, 8
        %s478 = scalar_lea.vmem %s1, %s477
        %v480 = vld [vmem:[%s474] sm:$0xff]
        %v481 = vld [vmem:[%s478] sm:$0xff]
        %v482 = vadd.f32 %v480, %v481
        %v483 = vld [vmem:[%s2] sm:$0x1]
        %v484 = vld [vmem:[%s3] sm:$0x1]
        %vm485 = vcmask 261120
        %v486 = vsel %vm485, %v482, 0.0
        %487 = vadd.xlane.f32.xlu0 %v486
        %v488 = vpop.xlane.xlu0 %487
        %v489 = vrcp.pop 32.0
        %v490 = vmul.f32 %v488, %v489
        %v491 = vsub.f32 %v482, %v490
        %v492 = vmul.f32 %v491, %v491
        %v493 = vsel %vm485, %v492, 0.0
        %494 = vadd.xlane.f32.xlu0 %v493
        %v495 = vpop.xlane.xlu0 %494
        %v496 = vmul.f32 %v495, %v489
        %v497 = vadd.f32 %v496, 1e-05
        %v498 = vrsqrt.pop %v497
        %v499 = vmul.f32 %v491, %v498
        %v501 = vlaneseq
        %v502 = vshrl.u32 %v501, 7
        %v503 = vsub.s32 0, %v502
        %v504 = vrot.slane %v483, %v503
        %v506 = vmul.f32 %v499, %v504
        %v508 = vlaneseq
        %v509 = vshrl.u32 %v508, 7
        %v510 = vsub.s32 0, %v509
        %v511 = vrot.slane %v484, %v510
        %v513 = vadd.f32 %v506, %v511
        %v514 = vpack.c.bf16 %v513, %v513
        %v515 = vld [vmem:[%s4] sm:$0xf]
        %v516 = vld [vmem:[%s4 + $0x4] sm:$0xf]
        %v517 = vld [vmem:[%s4 + $0x8] sm:$0xf]
        %v518 = vld [vmem:[%s4 + $0xc] sm:$0xf]
        %v523 = vunpack.c.l.b16 %v515
        %v524 = vunpack.c.l.b16 %v516
        %v525 = vunpack.c.l.b16 %v517
        %v526 = vunpack.c.l.b16 %v518
        %v527 = vpack.c.b16 %v524, %v523
        %v528 = vpack.c.b16 %v526, %v525
        %v532 = vsel %vm485, %v514, 0
        %534 = vmatprep.subr.bf16.mxu0 0
        %535 = vmatpush1.bf16.msra.mxu0 0
        %536 = vmatprep.subr.bf16.mxu0 0
        %537 = vmatpush1.bf16.msra.mxu0 0
        %538 = vmatprep.subr.bf16.mxu0 0
        %539 = vmatpush1.bf16.msra.mxu0 0
        %540 = vmatprep.subr.bf16.mxu0 0
        %541 = vmatpush1.bf16.msra.mxu0 0
        %542 = vmatprep.subr.bf16.mxu0 0
        %543 = vmatpush1.bf16.msra.mxu0 0
        %544 = vmatprep.subr.bf16.mxu0 0
        %545 = vmatpush1.bf16.msra.mxu0 0
        %546 = vmatprep.subr.bf16.mxu0 0
        %547 = vmatpush1.bf16.msra.mxu0 %v528
        %548 = vmatprep.subr.bf16.mxu0 0
        %549 = vmatpush1.bf16.msra.mxu0 %v527
        %550 = vmatprep.subr.bf16.mxu0 0
        %551 = vmatpush2.bf16.msra.mxu0 0
        %552 = vmatprep.subr.bf16.mxu0 0
        %553 = vmatpush2.bf16.msra.mxu0 0
        %554 = vmatprep.subr.bf16.mxu0 0
        %555 = vmatpush2.bf16.msra.mxu0 0
        %556 = vmatprep.subr.bf16.mxu0 0
        %557 = vmatpush2.bf16.msra.mxu0 0
        %558 = vmatprep.subr.bf16.mxu0 0
        %559 = vmatpush2.bf16.msra.mxu0 0
        %560 = vmatprep.subr.bf16.mxu0 0
        %561 = vmatpush2.bf16.msra.mxu0 0
        %562 = vmatprep.subr.bf16.mxu0 0
        %563 = vmatpush2.bf16.msra.mxu0 0
        %564 = vmatprep.subr.bf16.mxu0 0
        %565 = vmatpush2.bf16.msra.mxu0 0
        %566 = vmatprep.mubr.bf16.mxu0 0
        %567 = vmatmul.mubr.bf16.gmra.mxu0 %v532
        %v568 = vpop.f32.mrf.mxu0
        %v569 = vadd.f32 0.0, %v568
        %v570 = vpop.f32.mrf.mxu0
        %v571 = vpop.f32.mrf.mxu0
        %v572 = vpop.f32.mrf.mxu0
        %573 = vdwg.mxu0
        %v574 = vld [vmem:[%s6] sm:$0x1]
        %v576 = vlaneseq
        %v577 = vshrl.u32 %v576, 7
        %v578 = vsub.s32 0, %v577
        %v579 = vrot.slane %v574, %v578
        %v581 = vpack.c.bf16 %v569, %v569
        %583 = vrot.lane.b32.xlu0 %v581, 96
        %v584 = vpop.permute.xlu0 %583
        %vm585 = vcmask 64512
        %v587 = vsel %vm585, %v581, 0
        %v590 = vsel %vm585, %v584, 0
        %592 = vmatprep.subr.bf16.mxu0 0
        %593 = vmatpush1.bf16.xpose.msra.mxu0 0
        %594 = vmatprep.subr.bf16.mxu0 0
        %595 = vmatpush1.bf16.xpose.msra.mxu0 0
        %596 = vmatprep.subr.bf16.mxu0 0
        %597 = vmatpush1.bf16.xpose.msra.mxu0 0
        %598 = vmatprep.subr.bf16.mxu0 0
        %599 = vmatpush1.bf16.xpose.msra.mxu0 0
        %600 = vmatprep.subr.bf16.mxu0 0
        %601 = vmatpush1.bf16.xpose.msra.mxu0 0
        %602 = vmatprep.subr.bf16.mxu0 0
        %603 = vmatpush1.bf16.xpose.msra.mxu0 0
        %604 = vmatprep.subr.bf16.mxu0 0
        %605 = vmatpush1.bf16.xpose.msra.mxu0 0
        %606 = vmatprep.subr.bf16.mxu0 0
        %607 = vmatpush1.bf16.xpose.msra.mxu0 %v590
        %608 = vmatprep.subr.bf16.mxu0 0
        %609 = vmatpush2.bf16.xpose.msra.mxu0 0
        %610 = vmatprep.subr.bf16.mxu0 0
        %611 = vmatpush2.bf16.xpose.msra.mxu0 0
        %612 = vmatprep.subr.bf16.mxu0 0
        %613 = vmatpush2.bf16.xpose.msra.mxu0 0
        %614 = vmatprep.subr.bf16.mxu0 0
        %615 = vmatpush2.bf16.xpose.msra.mxu0 0
        %616 = vmatprep.subr.bf16.mxu0 0
        %617 = vmatpush2.bf16.xpose.msra.mxu0 0
        %618 = vmatprep.subr.bf16.mxu0 0
        %619 = vmatpush2.bf16.xpose.msra.mxu0 0
        %620 = vmatprep.subr.bf16.mxu0 0
        %621 = vmatpush2.bf16.xpose.msra.mxu0 0
        %622 = vmatprep.subr.bf16.mxu0 0
        %623 = vmatpush2.bf16.xpose.msra.mxu0 0
        %624 = vmatprep.mubr.bf16.mxu0 0
        %625 = vmatmul.mubr.bf16.gmra.mxu0 %v587
        %v626 = vpop.f32.mrf.mxu0
        %v627 = vadd.f32 0.0, %v626
        %v628 = vpop.f32.mrf.mxu0
        %v629 = vpop.f32.mrf.mxu0
        %v630 = vpop.f32.mrf.mxu0
        %631 = vdwg.mxu0
        %v632 = vsel %vm585, %v627, -inf
        %633 = vmax.xlane.f32.xlu0 %v632
        %v634 = vpop.xlane.xlu0 %633
        %v635 = vsub.f32 %v627, %v634
        %v636 = vmul.f32 %v635, 1.442695
        %v637 = vpow.pop %v636
        %v638 = vsel %vm585, %v637, 0.0
        %639 = vadd.xlane.f32.xlu0 %v638
        %v640 = vpop.xlane.xlu0 %639
        %v641 = vrcp.pop %v640
        %v642 = vmul.f32 %v637, %v641
        %v643 = vpack.c.bf16 %v642, %v642
        %644 = vrot.lane.b32.xlu0 %v581, 64
        %v645 = vpop.permute.xlu0 %644
        %v647 = vsel %vm585, %v643, 0
        %vm649 = vcmask 1043456
        %v651 = vsel %vm649, %v645, 0
        %653 = vmatprep.subr.bf16.mxu0 0
        %654 = vmatpush1.bf16.msra.mxu0 0
        %655 = vmatprep.subr.bf16.mxu0 0
        %656 = vmatpush1.bf16.msra.mxu0 0
        %657 = vmatprep.subr.bf16.mxu0 0
        %658 = vmatpush1.bf16.msra.mxu0 0
        %659 = vmatprep.subr.bf16.mxu0 0
        %660 = vmatpush1.bf16.msra.mxu0 0
        %661 = vmatprep.subr.bf16.mxu0 0
        %662 = vmatpush1.bf16.msra.mxu0 0
        %663 = vmatprep.subr.bf16.mxu0 0
        %664 = vmatpush1.bf16.msra.mxu0 0
        %665 = vmatprep.subr.bf16.mxu0 0
        %666 = vmatpush1.bf16.msra.mxu0 0
        %667 = vmatprep.subr.bf16.mxu0 0
        %668 = vmatpush1.bf16.msra.mxu0 %v651
        %669 = vmatprep.subr.bf16.mxu0 0
        %670 = vmatpush2.bf16.msra.mxu0 0
        %671 = vmatprep.subr.bf16.mxu0 0
        %672 = vmatpush2.bf16.msra.mxu0 0
        %673 = vmatprep.subr.bf16.mxu0 0
        %674 = vmatpush2.bf16.msra.mxu0 0
        %675 = vmatprep.subr.bf16.mxu0 0
        %676 = vmatpush2.bf16.msra.mxu0 0
        %677 = vmatprep.subr.bf16.mxu0 0
        %678 = vmatpush2.bf16.msra.mxu0 0
        %679 = vmatprep.subr.bf16.mxu0 0
        %680 = vmatpush2.bf16.msra.mxu0 0
        %681 = vmatprep.subr.bf16.mxu0 0
        %682 = vmatpush2.bf16.msra.mxu0 0
        %683 = vmatprep.subr.bf16.mxu0 0
        %684 = vmatpush2.bf16.msra.mxu0 0
        %685 = vmatprep.mubr.bf16.mxu0 0
        %686 = vmatmul.mubr.bf16.gmra.mxu0 %v647
        %v687 = vpop.f32.mrf.mxu0
        %v688 = vadd.f32 0.0, %v687
        %v689 = vpop.f32.mrf.mxu0
        %v690 = vpop.f32.mrf.mxu0
        %v691 = vpop.f32.mrf.mxu0
        %692 = vdwg.mxu0
        %v693 = vpack.c.bf16 %v688, %v688
        %v694 = vld [vmem:[%s5] sm:$0xf]
        %v696 = vsel %vm585, %v693, 0
        %v699 = vsel %vm649, %v694, 0
        %701 = vmatprep.subr.bf16.mxu0 0
        %702 = vmatpush1.bf16.msra.mxu0 0
        %703 = vmatprep.subr.bf16.mxu0 0
        %704 = vmatpush1.bf16.msra.mxu0 0
        %705 = vmatprep.subr.bf16.mxu0 0
        %706 = vmatpush1.bf16.msra.mxu0 0
        %707 = vmatprep.subr.bf16.mxu0 0
        %708 = vmatpush1.bf16.msra.mxu0 0
        %709 = vmatprep.subr.bf16.mxu0 0
        %710 = vmatpush1.bf16.msra.mxu0 0
        %711 = vmatprep.subr.bf16.mxu0 0
        %712 = vmatpush1.bf16.msra.mxu0 0
        %713 = vmatprep.subr.bf16.mxu0 0
        %714 = vmatpush1.bf16.msra.mxu0 0
        %715 = vmatprep.subr.bf16.mxu0 0
        %716 = vmatpush1.bf16.msra.mxu0 %v699
        %717 = vmatprep.subr.bf16.mxu0 0
        %718 = vmatpush2.bf16.msra.mxu0 0
        %719 = vmatprep.subr.bf16.mxu0 0
        %720 = vmatpush2.bf16.msra.mxu0 0
        %721 = vmatprep.subr.bf16.mxu0 0
        %722 = vmatpush2.bf16.msra.mxu0 0
        %723 = vmatprep.subr.bf16.mxu0 0
        %724 = vmatpush2.bf16.msra.mxu0 0
        %725 = vmatprep.subr.bf16.mxu0 0
        %726 = vmatpush2.bf16.msra.mxu0 0
        %727 = vmatprep.subr.bf16.mxu0 0
        %728 = vmatpush2.bf16.msra.mxu0 0
        %729 = vmatprep.subr.bf16.mxu0 0
        %730 = vmatpush2.bf16.msra.mxu0 0
        %731 = vmatprep.subr.bf16.mxu0 0
        %732 = vmatpush2.bf16.msra.mxu0 0
        %733 = vmatprep.mubr.bf16.mxu0 0
        %734 = vmatmul.mubr.bf16.gmra.mxu0 %v696
        %v735 = vpop.f32.mrf.mxu0
        %v736 = vadd.f32 0.0, %v735
        %v737 = vpop.f32.mrf.mxu0
        %v738 = vpop.f32.mrf.mxu0
        %v739 = vpop.f32.mrf.mxu0
        %740 = vdwg.mxu0
        %v741 = vadd.f32 %v579, %v736
        %742 = vrot.lane.b32.xlu0 %v581, 120
        %v743 = vpop.permute.xlu0 %742
        %744 = vrot.lane.b32.xlu0 %v581, 88
        %v745 = vpop.permute.xlu0 %744
        %v747 = vsel %vm585, %v743, 0
        %v750 = vsel %vm585, %v745, 0
        %752 = vmatprep.subr.bf16.mxu0 0
        %753 = vmatpush1.bf16.xpose.msra.mxu0 0
        %754 = vmatprep.subr.bf16.mxu0 0
        %755 = vmatpush1.bf16.xpose.msra.mxu0 0
        %756 = vmatprep.subr.bf16.mxu0 0
        %757 = vmatpush1.bf16.xpose.msra.mxu0 0
        %758 = vmatprep.subr.bf16.mxu0 0
        %759 = vmatpush1.bf16.xpose.msra.mxu0 0
        %760 = vmatprep.subr.bf16.mxu0 0
        %761 = vmatpush1.bf16.xpose.msra.mxu0 0
        %762 = vmatprep.subr.bf16.mxu0 0
        %763 = vmatpush1.bf16.xpose.msra.mxu0 0
        %764 = vmatprep.subr.bf16.mxu0 0
        %765 = vmatpush1.bf16.xpose.msra.mxu0 0
        %766 = vmatprep.subr.bf16.mxu0 0
        %767 = vmatpush1.bf16.xpose.msra.mxu0 %v750
        %768 = vmatprep.subr.bf16.mxu0 0
        %769 = vmatpush2.bf16.xpose.msra.mxu0 0
        %770 = vmatprep.subr.bf16.mxu0 0
        %771 = vmatpush2.bf16.xpose.msra.mxu0 0
        %772 = vmatprep.subr.bf16.mxu0 0
        %773 = vmatpush2.bf16.xpose.msra.mxu0 0
        %774 = vmatprep.subr.bf16.mxu0 0
        %775 = vmatpush2.bf16.xpose.msra.mxu0 0
        %776 = vmatprep.subr.bf16.mxu0 0
        %777 = vmatpush2.bf16.xpose.msra.mxu0 0
        %778 = vmatprep.subr.bf16.mxu0 0
        %779 = vmatpush2.bf16.xpose.msra.mxu0 0
        %780 = vmatprep.subr.bf16.mxu0 0
        %781 = vmatpush2.bf16.xpose.msra.mxu0 0
        %782 = vmatprep.subr.bf16.mxu0 0
        %783 = vmatpush2.bf16.xpose.msra.mxu0 0
        %784 = vmatprep.mubr.bf16.mxu0 0
        %785 = vmatmul.mubr.bf16.gmra.mxu0 %v747
        %v786 = vpop.f32.mrf.mxu0
        %v787 = vadd.f32 0.0, %v786
        %v788 = vpop.f32.mrf.mxu0
        %v789 = vpop.f32.mrf.mxu0
        %v790 = vpop.f32.mrf.mxu0
        %791 = vdwg.mxu0
        %v792 = vsel %vm585, %v787, -inf
        %793 = vmax.xlane.f32.xlu0 %v792
        %v794 = vpop.xlane.xlu0 %793
        %v795 = vsub.f32 %v787, %v794
        %v796 = vmul.f32 %v795, 1.442695
        %v797 = vpow.pop %v796
        %v798 = vsel %vm585, %v797, 0.0
        %799 = vadd.xlane.f32.xlu0 %v798
        %v800 = vpop.xlane.xlu0 %799
        %v801 = vrcp.pop %v800
        %v802 = vmul.f32 %v797, %v801
        %v803 = vpack.c.bf16 %v802, %v802
        %804 = vrot.lane.b32.xlu0 %v581, 56
        %v805 = vpop.permute.xlu0 %804
        %v807 = vsel %vm585, %v803, 0
        %v810 = vsel %vm649, %v805, 0
        %812 = vmatprep.subr.bf16.mxu0 0
        %813 = vmatpush1.bf16.msra.mxu0 0
        %814 = vmatprep.subr.bf16.mxu0 0
        %815 = vmatpush1.bf16.msra.mxu0 0
        %816 = vmatprep.subr.bf16.mxu0 0
        %817 = vmatpush1.bf16.msra.mxu0 0
        %818 = vmatprep.subr.bf16.mxu0 0
        %819 = vmatpush1.bf16.msra.mxu0 0
        %820 = vmatprep.subr.bf16.mxu0 0
        %821 = vmatpush1.bf16.msra.mxu0 0
        %822 = vmatprep.subr.bf16.mxu0 0
        %823 = vmatpush1.bf16.msra.mxu0 0
        %824 = vmatprep.subr.bf16.mxu0 0
        %825 = vmatpush1.bf16.msra.mxu0 0
        %826 = vmatprep.subr.bf16.mxu0 0
        %827 = vmatpush1.bf16.msra.mxu0 %v810
        %828 = vmatprep.subr.bf16.mxu0 0
        %829 = vmatpush2.bf16.msra.mxu0 0
        %830 = vmatprep.subr.bf16.mxu0 0
        %831 = vmatpush2.bf16.msra.mxu0 0
        %832 = vmatprep.subr.bf16.mxu0 0
        %833 = vmatpush2.bf16.msra.mxu0 0
        %834 = vmatprep.subr.bf16.mxu0 0
        %835 = vmatpush2.bf16.msra.mxu0 0
        %836 = vmatprep.subr.bf16.mxu0 0
        %837 = vmatpush2.bf16.msra.mxu0 0
        %838 = vmatprep.subr.bf16.mxu0 0
        %839 = vmatpush2.bf16.msra.mxu0 0
        %840 = vmatprep.subr.bf16.mxu0 0
        %841 = vmatpush2.bf16.msra.mxu0 0
        %842 = vmatprep.subr.bf16.mxu0 0
        %843 = vmatpush2.bf16.msra.mxu0 0
        %844 = vmatprep.mubr.bf16.mxu0 0
        %845 = vmatmul.mubr.bf16.gmra.mxu0 %v807
        %v846 = vpop.f32.mrf.mxu0
        %v847 = vadd.f32 0.0, %v846
        %v848 = vpop.f32.mrf.mxu0
        %v849 = vpop.f32.mrf.mxu0
        %v850 = vpop.f32.mrf.mxu0
        %851 = vdwg.mxu0
        %v852 = vpack.c.bf16 %v847, %v847
        %s853 = scalar_lea.vmem %s5, 4
        %v854 = vld [vmem:[%s853] sm:$0xf]
        %v856 = vsel %vm585, %v852, 0
        %v859 = vsel %vm649, %v854, 0
        %861 = vmatprep.subr.bf16.mxu0 0
        %862 = vmatpush1.bf16.msra.mxu0 0
        %863 = vmatprep.subr.bf16.mxu0 0
        %864 = vmatpush1.bf16.msra.mxu0 0
        %865 = vmatprep.subr.bf16.mxu0 0
        %866 = vmatpush1.bf16.msra.mxu0 0
        %867 = vmatprep.subr.bf16.mxu0 0
        %868 = vmatpush1.bf16.msra.mxu0 0
        %869 = vmatprep.subr.bf16.mxu0 0
        %870 = vmatpush1.bf16.msra.mxu0 0
        %871 = vmatprep.subr.bf16.mxu0 0
        %872 = vmatpush1.bf16.msra.mxu0 0
        %873 = vmatprep.subr.bf16.mxu0 0
        %874 = vmatpush1.bf16.msra.mxu0 0
        %875 = vmatprep.subr.bf16.mxu0 0
        %876 = vmatpush1.bf16.msra.mxu0 %v859
        %877 = vmatprep.subr.bf16.mxu0 0
        %878 = vmatpush2.bf16.msra.mxu0 0
        %879 = vmatprep.subr.bf16.mxu0 0
        %880 = vmatpush2.bf16.msra.mxu0 0
        %881 = vmatprep.subr.bf16.mxu0 0
        %882 = vmatpush2.bf16.msra.mxu0 0
        %883 = vmatprep.subr.bf16.mxu0 0
        %884 = vmatpush2.bf16.msra.mxu0 0
        %885 = vmatprep.subr.bf16.mxu0 0
        %886 = vmatpush2.bf16.msra.mxu0 0
        %887 = vmatprep.subr.bf16.mxu0 0
        %888 = vmatpush2.bf16.msra.mxu0 0
        %889 = vmatprep.subr.bf16.mxu0 0
        %890 = vmatpush2.bf16.msra.mxu0 0
        %891 = vmatprep.subr.bf16.mxu0 0
        %892 = vmatpush2.bf16.msra.mxu0 0
        %893 = vmatprep.mubr.bf16.mxu0 0
        %894 = vmatmul.mubr.bf16.gmra.mxu0 %v856
        %v895 = vpop.f32.mrf.mxu0
        %v896 = vadd.f32 0.0, %v895
        %v897 = vpop.f32.mrf.mxu0
        %v898 = vpop.f32.mrf.mxu0
        %v899 = vpop.f32.mrf.mxu0
        %900 = vdwg.mxu0
        %v901 = vadd.f32 %v741, %v896
        %902 = vrot.lane.b32.xlu0 %v581, 112
        %v903 = vpop.permute.xlu0 %902
        %904 = vrot.lane.b32.xlu0 %v581, 80
        %v905 = vpop.permute.xlu0 %904
        %v907 = vsel %vm585, %v903, 0
        %v910 = vsel %vm585, %v905, 0
        %912 = vmatprep.subr.bf16.mxu0 0
        %913 = vmatpush1.bf16.xpose.msra.mxu0 0
        %914 = vmatprep.subr.bf16.mxu0 0
        %915 = vmatpush1.bf16.xpose.msra.mxu0 0
        %916 = vmatprep.subr.bf16.mxu0 0
        %917 = vmatpush1.bf16.xpose.msra.mxu0 0
        %918 = vmatprep.subr.bf16.mxu0 0
        %919 = vmatpush1.bf16.xpose.msra.mxu0 0
        %920 = vmatprep.subr.bf16.mxu0 0
        %921 = vmatpush1.bf16.xpose.msra.mxu0 0
        %922 = vmatprep.subr.bf16.mxu0 0
        %923 = vmatpush1.bf16.xpose.msra.mxu0 0
        %924 = vmatprep.subr.bf16.mxu0 0
        %925 = vmatpush1.bf16.xpose.msra.mxu0 0
        %926 = vmatprep.subr.bf16.mxu0 0
        %927 = vmatpush1.bf16.xpose.msra.mxu0 %v910
        %928 = vmatprep.subr.bf16.mxu0 0
        %929 = vmatpush2.bf16.xpose.msra.mxu0 0
        %930 = vmatprep.subr.bf16.mxu0 0
        %931 = vmatpush2.bf16.xpose.msra.mxu0 0
        %932 = vmatprep.subr.bf16.mxu0 0
        %933 = vmatpush2.bf16.xpose.msra.mxu0 0
        %934 = vmatprep.subr.bf16.mxu0 0
        %935 = vmatpush2.bf16.xpose.msra.mxu0 0
        %936 = vmatprep.subr.bf16.mxu0 0
        %937 = vmatpush2.bf16.xpose.msra.mxu0 0
        %938 = vmatprep.subr.bf16.mxu0 0
        %939 = vmatpush2.bf16.xpose.msra.mxu0 0
        %940 = vmatprep.subr.bf16.mxu0 0
        %941 = vmatpush2.bf16.xpose.msra.mxu0 0
        %942 = vmatprep.subr.bf16.mxu0 0
        %943 = vmatpush2.bf16.xpose.msra.mxu0 0
        %944 = vmatprep.mubr.bf16.mxu0 0
        %945 = vmatmul.mubr.bf16.gmra.mxu0 %v907
        %v946 = vpop.f32.mrf.mxu0
        %v947 = vadd.f32 0.0, %v946
        %v948 = vpop.f32.mrf.mxu0
        %v949 = vpop.f32.mrf.mxu0
        %v950 = vpop.f32.mrf.mxu0
        %951 = vdwg.mxu0
        %v952 = vsel %vm585, %v947, -inf
        %953 = vmax.xlane.f32.xlu0 %v952
        %v954 = vpop.xlane.xlu0 %953
        %v955 = vsub.f32 %v947, %v954
        %v956 = vmul.f32 %v955, 1.442695
        %v957 = vpow.pop %v956
        %v958 = vsel %vm585, %v957, 0.0
        %959 = vadd.xlane.f32.xlu0 %v958
        %v960 = vpop.xlane.xlu0 %959
        %v961 = vrcp.pop %v960
        %v962 = vmul.f32 %v957, %v961
        %v963 = vpack.c.bf16 %v962, %v962
        %964 = vrot.lane.b32.xlu0 %v581, 48
        %v965 = vpop.permute.xlu0 %964
        %v967 = vsel %vm585, %v963, 0
        %v970 = vsel %vm649, %v965, 0
        %972 = vmatprep.subr.bf16.mxu0 0
        %973 = vmatpush1.bf16.msra.mxu0 0
        %974 = vmatprep.subr.bf16.mxu0 0
        %975 = vmatpush1.bf16.msra.mxu0 0
        %976 = vmatprep.subr.bf16.mxu0 0
        %977 = vmatpush1.bf16.msra.mxu0 0
        %978 = vmatprep.subr.bf16.mxu0 0
        %979 = vmatpush1.bf16.msra.mxu0 0
        %980 = vmatprep.subr.bf16.mxu0 0
        %981 = vmatpush1.bf16.msra.mxu0 0
        %982 = vmatprep.subr.bf16.mxu0 0
        %983 = vmatpush1.bf16.msra.mxu0 0
        %984 = vmatprep.subr.bf16.mxu0 0
        %985 = vmatpush1.bf16.msra.mxu0 0
        %986 = vmatprep.subr.bf16.mxu0 0
        %987 = vmatpush1.bf16.msra.mxu0 %v970
        %988 = vmatprep.subr.bf16.mxu0 0
        %989 = vmatpush2.bf16.msra.mxu0 0
        %990 = vmatprep.subr.bf16.mxu0 0
        %991 = vmatpush2.bf16.msra.mxu0 0
        %992 = vmatprep.subr.bf16.mxu0 0
        %993 = vmatpush2.bf16.msra.mxu0 0
        %994 = vmatprep.subr.bf16.mxu0 0
        %995 = vmatpush2.bf16.msra.mxu0 0
        %996 = vmatprep.subr.bf16.mxu0 0
        %997 = vmatpush2.bf16.msra.mxu0 0
        %998 = vmatprep.subr.bf16.mxu0 0
        %999 = vmatpush2.bf16.msra.mxu0 0
        %1000 = vmatprep.subr.bf16.mxu0 0
        %1001 = vmatpush2.bf16.msra.mxu0 0
        %1002 = vmatprep.subr.bf16.mxu0 0
        %1003 = vmatpush2.bf16.msra.mxu0 0
        %1004 = vmatprep.mubr.bf16.mxu0 0
        %1005 = vmatmul.mubr.bf16.gmra.mxu0 %v967
        %v1006 = vpop.f32.mrf.mxu0
        %v1007 = vadd.f32 0.0, %v1006
        %v1008 = vpop.f32.mrf.mxu0
        %v1009 = vpop.f32.mrf.mxu0
        %v1010 = vpop.f32.mrf.mxu0
        %1011 = vdwg.mxu0
        %v1012 = vpack.c.bf16 %v1007, %v1007
        %s1013 = scalar_lea.vmem %s5, 8
        %v1014 = vld [vmem:[%s1013] sm:$0xf]
        %v1016 = vsel %vm585, %v1012, 0
        %v1019 = vsel %vm649, %v1014, 0
        %1021 = vmatprep.subr.bf16.mxu0 0
        %1022 = vmatpush1.bf16.msra.mxu0 0
        %1023 = vmatprep.subr.bf16.mxu0 0
        %1024 = vmatpush1.bf16.msra.mxu0 0
        %1025 = vmatprep.subr.bf16.mxu0 0
        %1026 = vmatpush1.bf16.msra.mxu0 0
        %1027 = vmatprep.subr.bf16.mxu0 0
        %1028 = vmatpush1.bf16.msra.mxu0 0
        %1029 = vmatprep.subr.bf16.mxu0 0
        %1030 = vmatpush1.bf16.msra.mxu0 0
        %1031 = vmatprep.subr.bf16.mxu0 0
        %1032 = vmatpush1.bf16.msra.mxu0 0
        %1033 = vmatprep.subr.bf16.mxu0 0
        %1034 = vmatpush1.bf16.msra.mxu0 0
        %1035 = vmatprep.subr.bf16.mxu0 0
        %1036 = vmatpush1.bf16.msra.mxu0 %v1019
        %1037 = vmatprep.subr.bf16.mxu0 0
        %1038 = vmatpush2.bf16.msra.mxu0 0
        %1039 = vmatprep.subr.bf16.mxu0 0
        %1040 = vmatpush2.bf16.msra.mxu0 0
        %1041 = vmatprep.subr.bf16.mxu0 0
        %1042 = vmatpush2.bf16.msra.mxu0 0
        %1043 = vmatprep.subr.bf16.mxu0 0
        %1044 = vmatpush2.bf16.msra.mxu0 0
        %1045 = vmatprep.subr.bf16.mxu0 0
        %1046 = vmatpush2.bf16.msra.mxu0 0
        %1047 = vmatprep.subr.bf16.mxu0 0
        %1048 = vmatpush2.bf16.msra.mxu0 0
        %1049 = vmatprep.subr.bf16.mxu0 0
        %1050 = vmatpush2.bf16.msra.mxu0 0
        %1051 = vmatprep.subr.bf16.mxu0 0
        %1052 = vmatpush2.bf16.msra.mxu0 0
        %1053 = vmatprep.mubr.bf16.mxu0 0
        %1054 = vmatmul.mubr.bf16.gmra.mxu0 %v1016
        %v1055 = vpop.f32.mrf.mxu0
        %v1056 = vadd.f32 0.0, %v1055
        %v1057 = vpop.f32.mrf.mxu0
        %v1058 = vpop.f32.mrf.mxu0
        %v1059 = vpop.f32.mrf.mxu0
        %1060 = vdwg.mxu0
        %v1061 = vadd.f32 %v901, %v1056
        %1062 = vrot.lane.b32.xlu0 %v581, 104
        %v1063 = vpop.permute.xlu0 %1062
        %1064 = vrot.lane.b32.xlu0 %v581, 72
        %v1065 = vpop.permute.xlu0 %1064
        %v1067 = vsel %vm585, %v1063, 0
        %v1070 = vsel %vm585, %v1065, 0
        %1072 = vmatprep.subr.bf16.mxu0 0
        %1073 = vmatpush1.bf16.xpose.msra.mxu0 0
        %1074 = vmatprep.subr.bf16.mxu0 0
        %1075 = vmatpush1.bf16.xpose.msra.mxu0 0
        %1076 = vmatprep.subr.bf16.mxu0 0
        %1077 = vmatpush1.bf16.xpose.msra.mxu0 0
        %1078 = vmatprep.subr.bf16.mxu0 0
        %1079 = vmatpush1.bf16.xpose.msra.mxu0 0
        %1080 = vmatprep.subr.bf16.mxu0 0
        %1081 = vmatpush1.bf16.xpose.msra.mxu0 0
        %1082 = vmatprep.subr.bf16.mxu0 0
        %1083 = vmatpush1.bf16.xpose.msra.mxu0 0
        %1084 = vmatprep.subr.bf16.mxu0 0
        %1085 = vmatpush1.bf16.xpose.msra.mxu0 0
        %1086 = vmatprep.subr.bf16.mxu0 0
        %1087 = vmatpush1.bf16.xpose.msra.mxu0 %v1070
        %1088 = vmatprep.subr.bf16.mxu0 0
        %1089 = vmatpush2.bf16.xpose.msra.mxu0 0
        %1090 = vmatprep.subr.bf16.mxu0 0
        %1091 = vmatpush2.bf16.xpose.msra.mxu0 0
        %1092 = vmatprep.subr.bf16.mxu0 0
        %1093 = vmatpush2.bf16.xpose.msra.mxu0 0
        %1094 = vmatprep.subr.bf16.mxu0 0
        %1095 = vmatpush2.bf16.xpose.msra.mxu0 0
        %1096 = vmatprep.subr.bf16.mxu0 0
        %1097 = vmatpush2.bf16.xpose.msra.mxu0 0
        %1098 = vmatprep.subr.bf16.mxu0 0
        %1099 = vmatpush2.bf16.xpose.msra.mxu0 0
        %1100 = vmatprep.subr.bf16.mxu0 0
        %1101 = vmatpush2.bf16.xpose.msra.mxu0 0
        %1102 = vmatprep.subr.bf16.mxu0 0
        %1103 = vmatpush2.bf16.xpose.msra.mxu0 0
        %1104 = vmatprep.mubr.bf16.mxu0 0
        %1105 = vmatmul.mubr.bf16.gmra.mxu0 %v1067
        %v1106 = vpop.f32.mrf.mxu0
        %v1107 = vadd.f32 0.0, %v1106
        %v1108 = vpop.f32.mrf.mxu0
        %v1109 = vpop.f32.mrf.mxu0
        %v1110 = vpop.f32.mrf.mxu0
        %1111 = vdwg.mxu0
        %v1112 = vsel %vm585, %v1107, -inf
        %1113 = vmax.xlane.f32.xlu0 %v1112
        %v1114 = vpop.xlane.xlu0 %1113
        %v1115 = vsub.f32 %v1107, %v1114
        %v1116 = vmul.f32 %v1115, 1.442695
        %v1117 = vpow.pop %v1116
        %v1118 = vsel %vm585, %v1117, 0.0
        %1119 = vadd.xlane.f32.xlu0 %v1118
        %v1120 = vpop.xlane.xlu0 %1119
        %v1121 = vrcp.pop %v1120
        %v1122 = vmul.f32 %v1117, %v1121
        %v1123 = vpack.c.bf16 %v1122, %v1122
        %1124 = vrot.lane.b32.xlu0 %v581, 40
        %v1125 = vpop.permute.xlu0 %1124
        %v1127 = vsel %vm585, %v1123, 0
        %v1130 = vsel %vm649, %v1125, 0
        %1132 = vmatprep.subr.bf16.mxu0 0
        %1133 = vmatpush1.bf16.msra.mxu0 0
        %1134 = vmatprep.subr.bf16.mxu0 0
        %1135 = vmatpush1.bf16.msra.mxu0 0
        %1136 = vmatprep.subr.bf16.mxu0 0
        %1137 = vmatpush1.bf16.msra.mxu0 0
        %1138 = vmatprep.subr.bf16.mxu0 0
        %1139 = vmatpush1.bf16.msra.mxu0 0
        %1140 = vmatprep.subr.bf16.mxu0 0
        %1141 = vmatpush1.bf16.msra.mxu0 0
        %1142 = vmatprep.subr.bf16.mxu0 0
        %1143 = vmatpush1.bf16.msra.mxu0 0
        %1144 = vmatprep.subr.bf16.mxu0 0
        %1145 = vmatpush1.bf16.msra.mxu0 0
        %1146 = vmatprep.subr.bf16.mxu0 0
        %1147 = vmatpush1.bf16.msra.mxu0 %v1130
        %1148 = vmatprep.subr.bf16.mxu0 0
        %1149 = vmatpush2.bf16.msra.mxu0 0
        %1150 = vmatprep.subr.bf16.mxu0 0
        %1151 = vmatpush2.bf16.msra.mxu0 0
        %1152 = vmatprep.subr.bf16.mxu0 0
        %1153 = vmatpush2.bf16.msra.mxu0 0
        %1154 = vmatprep.subr.bf16.mxu0 0
        %1155 = vmatpush2.bf16.msra.mxu0 0
        %1156 = vmatprep.subr.bf16.mxu0 0
        %1157 = vmatpush2.bf16.msra.mxu0 0
        %1158 = vmatprep.subr.bf16.mxu0 0
        %1159 = vmatpush2.bf16.msra.mxu0 0
        %1160 = vmatprep.subr.bf16.mxu0 0
        %1161 = vmatpush2.bf16.msra.mxu0 0
        %1162 = vmatprep.subr.bf16.mxu0 0
        %1163 = vmatpush2.bf16.msra.mxu0 0
        %1164 = vmatprep.mubr.bf16.mxu0 0
        %1165 = vmatmul.mubr.bf16.gmra.mxu0 %v1127
        %v1166 = vpop.f32.mrf.mxu0
        %v1167 = vadd.f32 0.0, %v1166
        %v1168 = vpop.f32.mrf.mxu0
        %v1169 = vpop.f32.mrf.mxu0
        %v1170 = vpop.f32.mrf.mxu0
        %1171 = vdwg.mxu0
        %v1172 = vpack.c.bf16 %v1167, %v1167
        %s1173 = scalar_lea.vmem %s5, 12
        %v1174 = vld [vmem:[%s1173] sm:$0xf]
        %v1176 = vsel %vm585, %v1172, 0
        %v1179 = vsel %vm649, %v1174, 0
        %1181 = vmatprep.subr.bf16.mxu0 0
        %1182 = vmatpush1.bf16.msra.mxu0 0
        %1183 = vmatprep.subr.bf16.mxu0 0
        %1184 = vmatpush1.bf16.msra.mxu0 0
        %1185 = vmatprep.subr.bf16.mxu0 0
        %1186 = vmatpush1.bf16.msra.mxu0 0
        %1187 = vmatprep.subr.bf16.mxu0 0
        %1188 = vmatpush1.bf16.msra.mxu0 0
        %1189 = vmatprep.subr.bf16.mxu0 0
        %1190 = vmatpush1.bf16.msra.mxu0 0
        %1191 = vmatprep.subr.bf16.mxu0 0
        %1192 = vmatpush1.bf16.msra.mxu0 0
        %1193 = vmatprep.subr.bf16.mxu0 0
        %1194 = vmatpush1.bf16.msra.mxu0 0
        %1195 = vmatprep.subr.bf16.mxu0 0
        %1196 = vmatpush1.bf16.msra.mxu0 %v1179
        %1197 = vmatprep.subr.bf16.mxu0 0
        %1198 = vmatpush2.bf16.msra.mxu0 0
        %1199 = vmatprep.subr.bf16.mxu0 0
        %1200 = vmatpush2.bf16.msra.mxu0 0
        %1201 = vmatprep.subr.bf16.mxu0 0
        %1202 = vmatpush2.bf16.msra.mxu0 0
        %1203 = vmatprep.subr.bf16.mxu0 0
        %1204 = vmatpush2.bf16.msra.mxu0 0
        %1205 = vmatprep.subr.bf16.mxu0 0
        %1206 = vmatpush2.bf16.msra.mxu0 0
        %1207 = vmatprep.subr.bf16.mxu0 0
        %1208 = vmatpush2.bf16.msra.mxu0 0
        %1209 = vmatprep.subr.bf16.mxu0 0
        %1210 = vmatpush2.bf16.msra.mxu0 0
        %1211 = vmatprep.subr.bf16.mxu0 0
        %1212 = vmatpush2.bf16.msra.mxu0 0
        %1213 = vmatprep.mubr.bf16.mxu0 0
        %1214 = vmatmul.mubr.bf16.gmra.mxu0 %v1176
        %v1215 = vpop.f32.mrf.mxu0
        %v1216 = vadd.f32 0.0, %v1215
        %v1217 = vpop.f32.mrf.mxu0
        %v1218 = vpop.f32.mrf.mxu0
        %v1219 = vpop.f32.mrf.mxu0
        %1220 = vdwg.mxu0
        %v1221 = vadd.f32 %v1061, %v1216
        %v1222 = vadd.f32 %v482, %v1221
        %v1223 = vld [vmem:[%s7] sm:$0x1]
        %v1224 = vld [vmem:[#allocation2] sm:$0x1]
        %v1225 = vsel %vm485, %v1222, 0.0
        %1226 = vadd.xlane.f32.xlu0 %v1225
        %v1227 = vpop.xlane.xlu0 %1226
        %v1228 = vmul.f32 %v1227, %v489
        %v1229 = vsub.f32 %v1222, %v1228
        %v1230 = vmul.f32 %v1229, %v1229
        %v1231 = vsel %vm485, %v1230, 0.0
        %1232 = vadd.xlane.f32.xlu0 %v1231
        %v1233 = vpop.xlane.xlu0 %1232
        %v1234 = vmul.f32 %v1233, %v489
        %v1235 = vadd.f32 %v1234, 1e-05
        %v1236 = vrsqrt.pop %v1235
        %v1237 = vmul.f32 %v1229, %v1236
        %v1239 = vlaneseq
        %v1240 = vshrl.u32 %v1239, 7
        %v1241 = vsub.s32 0, %v1240
        %v1242 = vrot.slane %v1223, %v1241
        %v1244 = vmul.f32 %v1237, %v1242
        %v1246 = vlaneseq
        %v1247 = vshrl.u32 %v1246, 7
        %v1248 = vsub.s32 0, %v1247
        %v1249 = vrot.slane %v1224, %v1248
        %v1251 = vadd.f32 %v1244, %v1249
        %v1252 = vpack.c.bf16 %v1251, %v1251
        %v1253 = vld [vmem:[%s9] sm:$0xf]
        %v1254 = vld [vmem:[%s9 + $0x4] sm:$0xf]
        %v1255 = vld [vmem:[%s9 + $0x8] sm:$0xf]
        %v1256 = vld [vmem:[%s9 + $0xc] sm:$0xf]
        %v1257 = vld [vmem:[#allocation5] sm:$0x1]
        %v1259 = vlaneseq
        %v1260 = vshrl.u32 %v1259, 7
        %v1261 = vsub.s32 0, %v1260
        %v1262 = vrot.slane %v1257, %v1261
        %v1268 = vunpack.c.l.b16 %v1253
        %v1269 = vunpack.c.l.b16 %v1254
        %v1270 = vunpack.c.l.b16 %v1255
        %v1271 = vunpack.c.l.b16 %v1256
        %v1272 = vpack.c.b16 %v1269, %v1268
        %v1273 = vpack.c.b16 %v1271, %v1270
        %v1277 = vsel %vm485, %v1252, 0
        %1279 = vmatprep.subr.bf16.mxu0 0
        %1280 = vmatpush1.bf16.msra.mxu0 0
        %1281 = vmatprep.subr.bf16.mxu0 0
        %1282 = vmatpush1.bf16.msra.mxu0 0
        %1283 = vmatprep.subr.bf16.mxu0 0
        %1284 = vmatpush1.bf16.msra.mxu0 0
        %1285 = vmatprep.subr.bf16.mxu0 0
        %1286 = vmatpush1.bf16.msra.mxu0 0
        %1287 = vmatprep.subr.bf16.mxu0 0
        %1288 = vmatpush1.bf16.msra.mxu0 0
        %1289 = vmatprep.subr.bf16.mxu0 0
        %1290 = vmatpush1.bf16.msra.mxu0 0
        %1291 = vmatprep.subr.bf16.mxu0 0
        %1292 = vmatpush1.bf16.msra.mxu0 %v1273
        %1293 = vmatprep.subr.bf16.mxu0 0
        %1294 = vmatpush1.bf16.msra.mxu0 %v1272
        %1295 = vmatprep.subr.bf16.mxu0 0
        %1296 = vmatpush2.bf16.msra.mxu0 0
        %1297 = vmatprep.subr.bf16.mxu0 0
        %1298 = vmatpush2.bf16.msra.mxu0 0
        %1299 = vmatprep.subr.bf16.mxu0 0
        %1300 = vmatpush2.bf16.msra.mxu0 0
        %1301 = vmatprep.subr.bf16.mxu0 0
        %1302 = vmatpush2.bf16.msra.mxu0 0
        %1303 = vmatprep.subr.bf16.mxu0 0
        %1304 = vmatpush2.bf16.msra.mxu0 0
        %1305 = vmatprep.subr.bf16.mxu0 0
        %1306 = vmatpush2.bf16.msra.mxu0 0
        %1307 = vmatprep.subr.bf16.mxu0 0
        %1308 = vmatpush2.bf16.msra.mxu0 0
        %1309 = vmatprep.subr.bf16.mxu0 0
        %1310 = vmatpush2.bf16.msra.mxu0 0
        %1311 = vmatprep.mubr.bf16.mxu0 0
        %1312 = vmatmul.mubr.bf16.gmra.mxu0 %v1277
        %v1313 = vpop.f32.mrf.mxu0
        %v1314 = vadd.f32 %v1262, %v1313
        %v1315 = vpop.f32.mrf.mxu0
        %v1316 = vpop.f32.mrf.mxu0
        %v1317 = vpop.f32.mrf.mxu0
        %1318 = vdwg.mxu0
        %v1319 = vmul.f32 %v1314, 0.5
        %v1320 = vmul.f32 %v1314, 0.70710677
        %v1321 = verf.f32.pop %v1320
        %v1322 = vadd.f32 %v1321, 1.0
        %v1323 = vmul.f32 %v1319, %v1322
        %v1324 = vpack.c.bf16 %v1323, %v1323
        %v1325 = vld [vmem:[%s11] sm:$0xf]
        %v1326 = vld [vmem:[%s11 + $0x4] sm:$0xf]
        %v1327 = vld [vmem:[%s11 + $0x8] sm:$0xf]
        %v1328 = vld [vmem:[%s11 + $0xc] sm:$0xf]
        %v1329 = vld [vmem:[%s11 + $0x10] sm:$0xf]
        %v1330 = vld [vmem:[%s11 + $0x14] sm:$0xf]
        %v1331 = vld [vmem:[%s11 + $0x18] sm:$0xf]
        %v1332 = vld [vmem:[%s11 + $0x1c] sm:$0xf]
        %v1333 = vld [vmem:[%s11 + $0x20] sm:$0xf]
        %v1334 = vld [vmem:[%s11 + $0x24] sm:$0xf]
        %v1335 = vld [vmem:[%s11 + $0x28] sm:$0xf]
        %v1336 = vld [vmem:[%s11 + $0x2c] sm:$0xf]
        %v1337 = vld [vmem:[%s11 + $0x30] sm:$0xf]
        %v1338 = vld [vmem:[%s11 + $0x34] sm:$0xf]
        %v1339 = vld [vmem:[%s11 + $0x38] sm:$0xf]
        %v1340 = vld [vmem:[%s11 + $0x3c] sm:$0xf]
        %v1341 = vld [vmem:[%s12] sm:$0x1]
        %v1343 = vlaneseq
        %v1344 = vshrl.u32 %v1343, 7
        %v1345 = vsub.s32 0, %v1344
        %v1346 = vrot.slane %v1341, %v1345
        %v1364 = vunpack.c.l.b16 %v1325
        %v1365 = vunpack.c.l.b16 %v1326
        %v1366 = vunpack.c.l.b16 %v1327
        %v1367 = vunpack.c.l.b16 %v1328
        %v1368 = vunpack.c.l.b16 %v1329
        %v1369 = vunpack.c.l.b16 %v1330
        %v1370 = vunpack.c.l.b16 %v1331
        %v1371 = vunpack.c.l.b16 %v1332
        %v1372 = vunpack.c.l.b16 %v1333
        %v1373 = vunpack.c.l.b16 %v1334
        %v1374 = vunpack.c.l.b16 %v1335
        %v1375 = vunpack.c.l.b16 %v1336
        %v1376 = vunpack.c.l.b16 %v1337
        %v1377 = vunpack.c.l.b16 %v1338
        %v1378 = vunpack.c.l.b16 %v1339
        %v1379 = vunpack.c.l.b16 %v1340
        %v1380 = vpack.c.b16 %v1365, %v1364
        %v1381 = vpack.c.b16 %v1367, %v1366
        %v1382 = vpack.c.b16 %v1369, %v1368
        %v1383 = vpack.c.b16 %v1371, %v1370
        %v1384 = vpack.c.b16 %v1373, %v1372
        %v1385 = vpack.c.b16 %v1375, %v1374
        %v1386 = vpack.c.b16 %v1377, %v1376
        %v1387 = vpack.c.b16 %v1379, %v1378
        %1396 = vmatprep.subr.bf16.mxu0 0
        %1397 = vmatpush1.bf16.msra.mxu0 %v1387
        %1398 = vmatprep.subr.bf16.mxu0 0
        %1399 = vmatpush1.bf16.msra.mxu0 %v1386
        %1400 = vmatprep.subr.bf16.mxu0 0
        %1401 = vmatpush1.bf16.msra.mxu0 %v1385
        %1402 = vmatprep.subr.bf16.mxu0 0
        %1403 = vmatpush1.bf16.msra.mxu0 %v1384
        %1404 = vmatprep.subr.bf16.mxu0 0
        %1405 = vmatpush1.bf16.msra.mxu0 %v1383
        %1406 = vmatprep.subr.bf16.mxu0 0
        %1407 = vmatpush1.bf16.msra.mxu0 %v1382
        %1408 = vmatprep.subr.bf16.mxu0 0
        %1409 = vmatpush1.bf16.msra.mxu0 %v1381
        %1410 = vmatprep.subr.bf16.mxu0 0
        %1411 = vmatpush1.bf16.msra.mxu0 %v1380
        %1412 = vmatprep.subr.bf16.mxu0 0
        %1413 = vmatpush2.bf16.msra.mxu0 0
        %1414 = vmatprep.subr.bf16.mxu0 0
        %1415 = vmatpush2.bf16.msra.mxu0 0
        %1416 = vmatprep.subr.bf16.mxu0 0
        %1417 = vmatpush2.bf16.msra.mxu0 0
        %1418 = vmatprep.subr.bf16.mxu0 0
        %1419 = vmatpush2.bf16.msra.mxu0 0
        %1420 = vmatprep.subr.bf16.mxu0 0
        %1421 = vmatpush2.bf16.msra.mxu0 0
        %1422 = vmatprep.subr.bf16.mxu0 0
        %1423 = vmatpush2.bf16.msra.mxu0 0
        %1424 = vmatprep.subr.bf16.mxu0 0
        %1425 = vmatpush2.bf16.msra.mxu0 0
        %1426 = vmatprep.subr.bf16.mxu0 0
        %1427 = vmatpush2.bf16.msra.mxu0 0
        %1428 = vmatprep.mubr.bf16.mxu0 0
        %1429 = vmatmul.mubr.bf16.gmra.mxu0 %v1324
        %v1430 = vpop.f32.mrf.mxu0
        %v1431 = vadd.f32 %v1346, %v1430
        %v1432 = vpop.f32.mrf.mxu0
        %v1433 = vpop.f32.mrf.mxu0
        %v1434 = vpop.f32.mrf.mxu0
        %1435 = vdwg.mxu0
        %v1436 = vadd.f32 %v1222, %v1431
        %1437 = vst.msk [vmem:[%s470] sm:$0xff] %vm485, %v1436
        %s1438 = sand.u32 %s320, 1
        %s1439 = scalar_lea.sflag [#allocation4], %s1438
        %s1440 = sand.u32 %s320, 1
        %s1441 = smul.addr %s1440, 8
        %s1442 = scalar_lea.vmem [#allocation7], %s1441
        // Predicated region
        $region81: #{tpu_custom_call.1} parent=71 // pred_check
          %p1443 = pneg %p330
        $region82: #{tpu_custom_call.1} parent=71 // pred_check_branch
          %1445 = sbr.rel (%p1443) target = $region84
        $region83: #{tpu_custom_call.1} parent=71 // pred_region
          %s1447 = ssub.s32 128, 128
          %1448 = vsyncadd %s1439, %s1447
          %s1449 = smul.addr %s29, 128
          %s1450 = scalar_lea.hbm %s13, %s1449
          %s1452 = sshll.u32 %s1442, 4
          %s1453 = int_to_ptr.vmem [resolvable:$true] %s1452
          %1455 = dma.vmem_to_hbm [thread:$0]  %s1453, 128, %s1450, %s1439
        $region84: #{tpu_custom_call.1} parent=71 // pred_fallthru
          _
      $region72: #{tpu_custom_call.1} parent=5 // pred_fallthru
        _
      %p1456 = scmp.le.s32.totalorder 2, %s24
      // Predicated region
      $region85: #{tpu_custom_call.1} parent=5 // pred_check
        %p1457 = pneg %p1456
      $region86: #{tpu_custom_call.1} parent=5 // pred_check_branch
        %1459 = sbr.rel (%p1457) target = $region88
      $region87: #{tpu_custom_call.1} parent=5 // pred_region
        %s1460 = ssub.s32 %s24, 2
        // Predicated region
        $region89: #{tpu_custom_call.1} parent=87 // pred_check
          %p1461 = pneg %p336
        $region90: #{tpu_custom_call.1} parent=87 // pred_check_branch
          %1463 = sbr.rel (%p1461) target = $region92
        $region91: #{tpu_custom_call.1} parent=87 // pred_region
          %s1464 = sand.u32 %s321, 1
          %s1465 = scalar_lea.sflag [#allocation4], %s1464
          %s1466 = sand.u32 %s321, 1
          %s1467 = smul.addr %s1466, 8
          %s1468 = scalar_lea.vmem [#allocation7], %s1467
          %1469 = dma.done %s1465, 128
        $region92: #{tpu_custom_call.1} parent=87 // pred_fallthru
          _
      $region88: #{tpu_custom_call.1} parent=5 // pred_fallthru
        _
    $region6: #{tpu_custom_call.1} parent=1 // loop_footer
      %s28 = sadd.s32 1, %s24
    $region7: #{tpu_custom_call.1} parent=1 // loop_footer_branch
      %23 = sbr.rel target = $region3
    $region8: #{tpu_custom_call.1} parent=1 // loop_exit
      _
    %1470 = vsyncpa [#allocation3], 1
    %s1471 = scalar_lea.sflag [#allocation3], 1
    %1472 = vsyncpa %s1471, 1
    %1473 = vsyncpa [#allocation6], 1
    %1474 = vsyncpa [#allocation4], 1
    %s1475 = scalar_lea.sflag [#allocation4], 1
    %1476 = vsyncpa %s1475, 1

</llo_original>
